<compile_context>
chip_gen: v7x
topology: tpu7x:2x2x1
jax: 0.10.0
libtpu: 0.0.40
codegen_flags: <defaults>
</compile_context>

<pallas_src>
import functools

import jax
import jax.numpy as jnp
from jax import lax
from jax.experimental import pallas as pl
from jax.experimental.pallas import tpu as pltpu

BN_EPS = 1e-5
SQUASH_EPS = 1e-8


def _cdiv(a, b):
    return -(-a // b)


def _round_up(x, m):
    return _cdiv(x, m) * m


# -----------------------------------------------------------------------------
# Kernel 1: fused Conv2d(bias=False) + BatchNorm(eval) + ReLU, emitted as NCHW.
# -----------------------------------------------------------------------------
def _conv_bn_relu_kernel(x_ref, w_ref, scale_ref, shift_ref, sel_ref, o_ref, *,
                         bb, taps, slab, cout):
    """Per grid step: `bb` images.
    x_ref   : (bb, S*S, Rpad, Cin) bf16   space-to-batch'd stride phases
    w_ref   : (KH*KW, Cin, Cout)   bf16   tap-major conv weights
    scale   : (1, Cout) f32 BN scale      shift: (1, Cout) f32 BN shift
    sel_ref : (slab, OH*OW) f32           exact 0/1 valid-row compaction selector
    o_ref   : (bb, Cout, OH*OW) f32       output, directly in NCHW order
    """
    scale = scale_ref[...]
    shift = shift_ref[...]
    sel = sel_ref[...]
    for b in range(bb):
        acc = jnp.zeros((slab, cout), jnp.float32)
        # im2col fused: each tap is a contiguous row slab of one stride-phase image.
        for t, (p, start) in enumerate(taps):
            a = x_ref[b, p, pl.ds(start, slab), :]             # (slab, Cin) bf16
            acc = acc + jnp.dot(a, w_ref[t], preferred_element_type=jnp.float32)
        h = jnp.maximum(acc * scale + shift, 0.0)              # BN + ReLU in f32
        # Transposed epilogue: (Cout, slab) then exact 0/1 row-compaction on the
        # (idle) MXU -> (Cout, OH*OW) lands directly as NCHW, no channel padding.
        o_ref[b] = jnp.dot(jnp.transpose(h), sel, preferred_element_type=jnp.float32)


def fused_conv_bn_relu(x_nchw, w, scale, shift, stride):
    """x: (N,Cin,H,W) f32, w: (Cout,Cin,KH,KW) f32, scale/shift: (Cout,) f32.
    Returns relu(bn(conv(x))) laid out as (N, Cout, OH*OW) f32 (NCHW, spatial flat)."""
    N, Cin, H, W = x_nchw.shape
    Cout, _, KH, KW = w.shape
    S = stride
    OH = (H - KH) // S + 1
    OW = (W - KW) // S + 1
    OHW = OH * OW
    Hp, Wp = _cdiv(H, S), _cdiv(W, S)

    # Cast to bf16 once, BEFORE any layout work (review: halves the layout bytes).
    xh = jnp.transpose(x_nchw, (0, 2, 3, 1)).astype(jnp.bfloat16)       # NHWC
    # Space-to-batch the stride phases (single XLA layout pass over ~1x input bytes).
    xh = jnp.pad(xh, ((0, 0), (0, Hp * S - H), (0, Wp * S - W), (0, 0)))
    xp = xh.reshape(N, Hp, S, Wp, S, Cin).transpose(0, 2, 4, 1, 3, 5)   # (N,S,S,Hp,Wp,C)
    xf = xp.reshape(N, S * S, Hp * Wp, Cin)

    # Tap (ki,kj) reads phase (ki%S, kj%S) at contiguous rows [start, start+slab).
    taps = []
    for ki in range(KH):
        for kj in range(KW):
            taps.append(((ki % S) * S + (kj % S), (ki // S) * Wp + (kj // S)))
    slab = _round_up((OH - 1) * Wp + OW, 8)
    max_start = max(s for _, s in taps)
    rpad = _round_up(max(max_start + slab, Hp * Wp), 8)
    xf = jnp.pad(xf, ((0, 0), (0, 0), (0, rpad - Hp * Wp), (0, 0)))

    # Tap-major weights in raw bf16; BN scale stays in f32 (applied on the f32 acc).
    wt = jnp.transpose(w, (2, 3, 1, 0)).reshape(KH * KW, Cin, Cout).astype(jnp.bfloat16)
    scale2 = scale.reshape(1, Cout).astype(jnp.float32)
    shift2 = shift.reshape(1, Cout).astype(jnp.float32)

    # Exact 0/1 selector mapping slab row (oh*Wp + ow) -> output column (oh*OW + ow).
    m = jnp.arange(OHW)
    valid_rows = (m // OW) * Wp + (m % OW)
    sel = (jnp.arange(slab)[:, None] == valid_rows[None, :]).astype(jnp.float32)

    # Batch-block size: keep >=2 grid blocks whenever N allows (v7x: 2 TensorCores),
    # and keep double-buffered in+out blocks well under ~8 MiB (v7x VMEM is 64 MiB).
    per_img = S * S * rpad * Cin * 2 + Cout * OHW * 4
    bb = 1
    while N % (bb * 2) == 0 and N // (bb * 2) >= 2 and 4 * bb * per_img <= (8 << 20):
        bb *= 2

    kernel = functools.partial(_conv_bn_relu_kernel, bb=bb, taps=taps,
                               slab=slab, cout=Cout)
    return pl.pallas_call(
        kernel,
        out_shape=jax.ShapeDtypeStruct((N, Cout, OHW), jnp.float32),
        grid_spec=pl.GridSpec(
            grid=(N // bb,),
            in_specs=[
                pl.BlockSpec((bb, S * S, rpad, Cin), lambda i: (i, 0, 0, 0)),
                pl.BlockSpec((KH * KW, Cin, Cout), lambda i: (0, 0, 0)),
                pl.BlockSpec((1, Cout), lambda i: (0, 0)),
                pl.BlockSpec((1, Cout), lambda i: (0, 0)),
                pl.BlockSpec((slab, OHW), lambda i: (0, 0)),
            ],
            out_specs=pl.BlockSpec((bb, Cout, OHW), lambda i: (i, 0, 0)),
        ),
        compiler_params=pltpu.CompilerParams(dimension_semantics=("parallel",)),
    )(xf, wt, scale2, shift2, sel)


# -----------------------------------------------------------------------------
# Kernel 2: capsule squash on a lane-dense (rows, 128) view of the NCHW data.
# -----------------------------------------------------------------------------
def _squash_grouped_kernel(x_ref, s_ref, o_ref):
    x = x_ref[...]                                        # (tm, 128) f32
    xb = x.astype(jnp.bfloat16)
    # Segmented squared-norm: one bf16 0/1-selector matmul on the otherwise-idle MXU.
    sn = jnp.dot(xb * xb, s_ref[...], preferred_element_type=jnp.float32)
    denom = (1.0 + sn) * (jnp.sqrt(sn) + SQUASH_EPS)
    o_ref[...] = (x * sn * pl.reciprocal(denom, approx=True)).astype(o_ref.dtype)


def _squash_rows_kernel(x_ref, o_ref):
    x = x_ref[...]                                        # (tm, D) f32
    sn = jnp.sum(x * x, axis=-1, keepdims=True)
    denom = (1.0 + sn) * (jnp.sqrt(sn) + SQUASH_EPS)
    o_ref[...] = (x * sn * pl.reciprocal(denom, approx=True)).astype(o_ref.dtype)


def squash_pallas(v):
    """v: (B, N, D) f32 -> squash over the last axis."""
    B, N, D = v.shape
    if 128 % D == 0:
        L = 128
        flat = v.reshape(-1)
        total = flat.shape[0]
        R = _cdiv(total, L)
        # >=2 grid blocks when possible (v7x megacore); 2048-row cap = 1 MiB blocks,
        # amortizes the ~0.35us/step overhead and fits every generation's VMEM.
        tm = min(2048, _round_up(max(_cdiv(R, 2), 1), 8))
        Rp = _round_up(R, tm)
        flat = jnp.pad(flat, (0, Rp * L - total))          # zero rows squash to 0
        xm = flat.reshape(Rp, L)
        idx = jnp.arange(L) // D
        sel = (idx[:, None] == idx[None, :]).astype(jnp.bfloat16)   # hoisted selector
        out = pl.pallas_call(
            _squash_grouped_kernel,
            out_shape=jax.ShapeDtypeStruct((Rp, L), jnp.float32),
            grid_spec=pl.GridSpec(
                grid=(Rp // tm,),
                in_specs=[pl.BlockSpec((tm, L), lambda i: (i, 0)),
                          pl.BlockSpec((L, L), lambda i: (0, 0))],
                out_specs=pl.BlockSpec((tm, L), lambda i: (i, 0)),
            ),
            compiler_params=pltpu.CompilerParams(dimension_semantics=("parallel",)),
        )(xm, sel)
        return out.reshape(-1)[:total].reshape(B, N, D)

    # Fallback (capsule dim does not divide 128): lane-sparse but correct.
    R = B * N
    tm = min(2048, _round_up(max(_cdiv(R, 2), 1), 8))
    Rp = _round_up(R, tm)
    xm = jnp.pad(v.reshape(R, D), ((0, Rp - R), (0, 0)))
    out = pl.pallas_call(
        _squash_rows_kernel,
        out_shape=jax.ShapeDtypeStruct((Rp, D), jnp.float32),
        grid_spec=pl.GridSpec(
            grid=(Rp // tm,),
            in_specs=[pl.BlockSpec((tm, D), lambda i: (i, 0))],
            out_specs=pl.BlockSpec((tm, D), lambda i: (i, 0)),
        ),
        compiler_params=pltpu.CompilerParams(dimension_semantics=("parallel",)),
    )(xm)
    return out[:R].reshape(B, N, D)


# -----------------------------------------------------------------------------
# Full PrimaryCaps forward
# -----------------------------------------------------------------------------
@functools.partial(jax.jit, static_argnames=("stride", "padding", "caps_dim"))
def primary_caps_forward(x_nchw, w, gamma, beta, mean, var, *,
                         stride, padding, caps_dim):
    if padding > 0:  # ReflectionPad2d (PrimaryCaps always passes padding=0)
        x_nchw = jnp.pad(x_nchw, ((0, 0), (0, 0),
                                  (padding, padding), (padding, padding)),
                         mode="reflect")
    scale = gamma * lax.rsqrt(var + BN_EPS)
    shift = beta - mean * scale                            # conv bias=False
    y = fused_conv_bn_relu(x_nchw, w, scale, shift, stride)  # (N, Cout, OH*OW), NCHW
    B = y.shape[0]
    v = y.reshape(B, -1, caps_dim)                         # contiguous NCHW -> capsules
    return squash_pallas(v)


# -----------------------------------------------------------------------------
# Pure-JAX reference (mirrors the PyTorch module in eval mode)
# -----------------------------------------------------------------------------
def ref_forward(x, w, gamma, beta, mean, var, *, stride, padding, caps_dim):
    if padding > 0:
        x = jnp.pad(x, ((0, 0), (0, 0), (padding, padding), (padding, padding)),
                    mode="reflect")
    y = lax.conv_general_dilated(
        x, w, (stride, stride), "VALID",
        dimension_numbers=("NCHW", "OIHW", "NCHW"),
        precision=lax.Precision.HIGHEST)
    s = (gamma * lax.rsqrt(var + BN_EPS))[None, :, None, None]
    y = (y - mean[None, :, None, None]) * s + beta[None, :, None, None]
    y = jnp.maximum(y, 0.0)
    B = y.shape[0]
    v = y.reshape(B, -1, caps_dim)
    sn = jnp.sum(v * v, axis=-1, keepdims=True)
    return sn / (1.0 + sn) * v / (jnp.sqrt(sn) + SQUASH_EPS)


if __name__ == "__main__":
    # PrimaryCaps(num_conv_units=4, in_channels=4, out_channels=8,
    #             kernel_size=3, stride=2); input (2, 4, 16, 16).
    B, Cin, H, W = 2, 4, 16, 16
    num_conv_units, caps_dim, ksz, stride = 4, 8, 3, 2
    Ctot = num_conv_units * caps_dim                      # 32

    key = jax.random.PRNGKey(0)
    kx, kw, k1, k2, k3, k4 = jax.random.split(key, 6)
    x = jax.random.normal(kx, (B, Cin, H, W), jnp.float32)
    w = 0.1 * jax.random.normal(kw, (Ctot, Cin, ksz, ksz), jnp.float32)
    gamma = 1.0 + 0.1 * jax.random.normal(k1, (Ctot,), jnp.float32)
    beta = 0.1 * jax.random.normal(k2, (Ctot,), jnp.float32)
    mean = 0.1 * jax.random.normal(k3, (Ctot,), jnp.float32)
    var = 0.5 + jax.random.uniform(k4, (Ctot,), jnp.float32)

    out = primary_caps_forward(x, w, gamma, beta, mean, var,
                               stride=stride, padding=0, caps_dim=caps_dim)
    out = jax.block_until_ready(out)

    OH = (H - ksz) // stride + 1
    n_caps = Ctot * OH * OH // caps_dim
    assert out.shape == (B, n_caps, caps_dim), out.shape

    ref = jax.block_until_ready(
        ref_forward(x, w, gamma, beta, mean, var,
                    stride=stride, padding=0, caps_dim=caps_dim))

    if bool(jnp.allclose(out, ref, rtol=2e-2, atol=2e-2)):
        print("KERNEL_OK")
    else:
        print("MISMATCH max abs diff:", float(jnp.max(jnp.abs(out - ref))))
</pallas_src>

<mosaic_0001>
module attributes {stable_mosaic.version = 11 : i64} {
  func.func @_squash_grouped_kernel(%arg0: i32, %arg1: memref<16x128xf32, #tpu.memory_space<vmem>>, %arg2: memref<128x128xbf16, #tpu.memory_space<vmem>>, %arg3: memref<16x128xf32, #tpu.memory_space<vmem>>) attributes {dimension_semantics = [#tpu.dimension_semantics<parallel>], iteration_bounds = array<i64: 2>, scalar_prefetch = 0 : i64, scratch_operands = 0 : i64, tpu.core_type = #tpu.core_type<tc>, window_params = [{transform_indices = @transform_0, window_bounds = array<i64: 16, 128>}, {pipeline_mode = #tpu.pipeline_mode<synchronous>, transform_indices = @transform_1, window_bounds = array<i64: 128, 128>}, {transform_indices = @transform_2, window_bounds = array<i64: 16, 128>}]} {
    %c0 = arith.constant 0 : index
    %c0_0 = arith.constant 0 : index
    %0 = vector.load %arg1[%c0, %c0_0] : memref<16x128xf32, #tpu.memory_space<vmem>>, vector<16x128xf32>
    %1 = arith.truncf %0 : vector<16x128xf32> to vector<16x128xbf16>
    %2 = arith.mulf %1, %1 : vector<16x128xbf16>
    %c0_1 = arith.constant 0 : index
    %c0_2 = arith.constant 0 : index
    %3 = vector.load %arg2[%c0_1, %c0_2] : memref<128x128xbf16, #tpu.memory_space<vmem>>, vector<128x128xbf16>
    %cst = arith.constant dense<0.000000e+00> : vector<16x128xf32>
    %4 = tpu.matmul %2, %3, %cst {dimension_numbers = #tpu.dot_dimension_numbers<[1], [0], [0], [1], [0, 0, 1, 1], [], []>} : vector<16x128xbf16>, vector<128x128xbf16>, vector<16x128xf32> -> vector<16x128xf32>
    %cst_3 = arith.constant 1.000000e+00 : f32
    %5 = vector.broadcast %cst_3 : f32 to vector<16x128xf32>
    %6 = arith.addf %5, %4 : vector<16x128xf32>
    %7 = math.sqrt %4 : vector<16x128xf32>
    %cst_4 = arith.constant 9.99999993E-9 : f32
    %8 = vector.broadcast %cst_4 : f32 to vector<16x128xf32>
    %9 = arith.addf %7, %8 : vector<16x128xf32>
    %10 = arith.mulf %6, %9 : vector<16x128xf32>
    %11 = arith.mulf %0, %4 : vector<16x128xf32>
    %12 = tpu.reciprocal %10 {approx = true} : vector<16x128xf32> -> vector<16x128xf32>
    %13 = arith.mulf %11, %12 : vector<16x128xf32>
    %c0_5 = arith.constant 0 : index
    %c0_6 = arith.constant 0 : index
    %14 = vector.load %arg3[%c0_5, %c0_6] : memref<16x128xf32, #tpu.memory_space<vmem>>, vector<16x128xf32>
    tpu.vector_store %arg3[%c0_5, %c0_6], %13 {strides = array<i32>} : memref<16x128xf32, #tpu.memory_space<vmem>>, vector<16x128xf32>,
    return
  }
  func.func @transform_0(%arg0: i32) -> (i32, i32) {
    %c0_i32 = arith.constant 0 : i32
    %c0_i32_0 = arith.constant 0 : i32
    return %arg0, %c0_i32 : i32, i32
  }
  func.func @transform_1(%arg0: i32) -> (i32, i32) {
    %c0_i32 = arith.constant 0 : i32
    %c0_i32_0 = arith.constant 0 : i32
    %c0_i32_1 = arith.constant 0 : i32
    return %c0_i32, %c0_i32_0 : i32, i32
  }
  func.func @transform_2(%arg0: i32) -> (i32, i32) {
    %c0_i32 = arith.constant 0 : i32
    %c0_i32_0 = arith.constant 0 : i32
    return %arg0, %c0_i32 : i32, i32
  }
}

module attributes {stable_mosaic.version = 11 : i64} {
  func.func @_conv_bn_relu_kernel(%arg0: i32, %arg1: memref<1x4x72x4xbf16, #tpu.memory_space<vmem>>, %arg2: memref<9x4x32xbf16, #tpu.memory_space<vmem>>, %arg3: memref<1x32xf32, #tpu.memory_space<vmem>>, %arg4: memref<1x32xf32, #tpu.memory_space<vmem>>, %arg5: memref<56x49xf32, #tpu.memory_space<vmem>>, %arg6: memref<1x32x49xf32, #tpu.memory_space<vmem>>) attributes {dimension_semantics = [#tpu.dimension_semantics<parallel>], iteration_bounds = array<i64: 2>, scalar_prefetch = 0 : i64, scratch_operands = 0 : i64, tpu.core_type = #tpu.core_type<tc>, window_params = [{transform_indices = @transform_0, window_bounds = array<i64: 1, 4, 72, 4>}, {pipeline_mode = #tpu.pipeline_mode<synchronous>, transform_indices = @transform_1, window_bounds = array<i64: 9, 4, 32>}, {pipeline_mode = #tpu.pipeline_mode<synchronous>, transform_indices = @transform_2, window_bounds = array<i64: 1, 32>}, {pipeline_mode = #tpu.pipeline_mode<synchronous>, transform_indices = @transform_3, window_bounds = array<i64: 1, 32>}, {pipeline_mode = #tpu.pipeline_mode<synchronous>, transform_indices = @transform_4, window_bounds = array<i64: 56, 49>}, {transform_indices = @transform_5, window_bounds = array<i64: 1, 32, 49>}]} {
    %c0 = arith.constant 0 : index
    %c0_0 = arith.constant 0 : index
    %0 = vector.load %arg3[%c0, %c0_0] : memref<1x32xf32, #tpu.memory_space<vmem>>, vector<1x32xf32>
    %c0_1 = arith.constant 0 : index
    %c0_2 = arith.constant 0 : index
    %1 = vector.load %arg4[%c0_1, %c0_2] : memref<1x32xf32, #tpu.memory_space<vmem>>, vector<1x32xf32>
    %c0_3 = arith.constant 0 : index
    %c0_4 = arith.constant 0 : index
    %2 = vector.load %arg5[%c0_3, %c0_4] : memref<56x49xf32, #tpu.memory_space<vmem>>, vector<56x49xf32>
    %cst = arith.constant 0.000000e+00 : f32
    %3 = vector.broadcast %cst : f32 to vector<56x32xf32>
    %c0_5 = arith.constant 0 : index
    %c0_6 = arith.constant 0 : index
    %c0_7 = arith.constant 0 : index
    %c0_8 = arith.constant 0 : index
    %4 = vector.load %arg1[%c0_5, %c0_6, %c0_7, %c0_8] : memref<1x4x72x4xbf16, #tpu.memory_space<vmem>>, vector<1x1x56x4xbf16>
    %5 = vector.shape_cast %4 : vector<1x1x56x4xbf16> to vector<56x4xbf16>
    %c0_9 = arith.constant 0 : index
    %c0_10 = arith.constant 0 : index
    %c0_11 = arith.constant 0 : index
    %6 = vector.load %arg2[%c0_9, %c0_10, %c0_11] : memref<9x4x32xbf16, #tpu.memory_space<vmem>>, vector<1x4x32xbf16>
    %7 = vector.shape_cast %6 : vector<1x4x32xbf16> to vector<4x32xbf16>
    %cst_12 = arith.constant dense<0.000000e+00> : vector<56x32xf32>
    %8 = tpu.matmul %5, %7, %cst_12 {dimension_numbers = #tpu.dot_dimension_numbers<[1], [0], [0], [1], [0, 0, 1, 1], [], []>} : vector<56x4xbf16>, vector<4x32xbf16>, vector<56x32xf32> -> vector<56x32xf32>
    %9 = arith.addf %3, %8 : vector<56x32xf32>
    %c0_13 = arith.constant 0 : index
    %c1 = arith.constant 1 : index
    %c0_14 = arith.constant 0 : index
    %c0_15 = arith.constant 0 : index
    %10 = vector.load %arg1[%c0_13, %c1, %c0_14, %c0_15] : memref<1x4x72x4xbf16, #tpu.memory_space<vmem>>, vector<1x1x56x4xbf16>
    %11 = vector.shape_cast %10 : vector<1x1x56x4xbf16> to vector<56x4xbf16>
    %c1_16 = arith.constant 1 : index
    %c0_17 = arith.constant 0 : index
    %c0_18 = arith.constant 0 : index
    %12 = vector.load %arg2[%c1_16, %c0_17, %c0_18] : memref<9x4x32xbf16, #tpu.memory_space<vmem>>, vector<1x4x32xbf16>
    %13 = vector.shape_cast %12 : vector<1x4x32xbf16> to vector<4x32xbf16>
    %cst_19 = arith.constant dense<0.000000e+00> : vector<56x32xf32>
    %14 = tpu.matmul %11, %13, %cst_19 {dimension_numbers = #tpu.dot_dimension_numbers<[1], [0], [0], [1], [0, 0, 1, 1], [], []>} : vector<56x4xbf16>, vector<4x32xbf16>, vector<56x32xf32> -> vector<56x32xf32>
    %15 = arith.addf %9, %14 : vector<56x32xf32>
    %c0_20 = arith.constant 0 : index
    %c0_21 = arith.constant 0 : index
    %c1_22 = arith.constant 1 : index
    %c0_23 = arith.constant 0 : index
    %16 = vector.load %arg1[%c0_20, %c0_21, %c1_22, %c0_23] : memref<1x4x72x4xbf16, #tpu.memory_space<vmem>>, vector<1x1x56x4xbf16>
    %17 = vector.shape_cast %16 : vector<1x1x56x4xbf16> to vector<56x4xbf16>
    %c2 = arith.constant 2 : index
    %c0_24 = arith.constant 0 : index
    %c0_25 = arith.constant 0 : index
    %18 = vector.load %arg2[%c2, %c0_24, %c0_25] : memref<9x4x32xbf16, #tpu.memory_space<vmem>>, vector<1x4x32xbf16>
    %19 = vector.shape_cast %18 : vector<1x4x32xbf16> to vector<4x32xbf16>
    %cst_26 = arith.constant dense<0.000000e+00> : vector<56x32xf32>
    %20 = tpu.matmul %17, %19, %cst_26 {dimension_numbers = #tpu.dot_dimension_numbers<[1], [0], [0], [1], [0, 0, 1, 1], [], []>} : vector<56x4xbf16>, vector<4x32xbf16>, vector<56x32xf32> -> vector<56x32xf32>
    %21 = arith.addf %15, %20 : vector<56x32xf32>
    %c0_27 = arith.constant 0 : index
    %c2_28 = arith.constant 2 : index
    %c0_29 = arith.constant 0 : index
    %c0_30 = arith.constant 0 : index
    %22 = vector.load %arg1[%c0_27, %c2_28, %c0_29, %c0_30] : memref<1x4x72x4xbf16, #tpu.memory_space<vmem>>, vector<1x1x56x4xbf16>
    %23 = vector.shape_cast %22 : vector<1x1x56x4xbf16> to vector<56x4xbf16>
    %c3 = arith.constant 3 : index
    %c0_31 = arith.constant 0 : index
    %c0_32 = arith.constant 0 : index
    %24 = vector.load %arg2[%c3, %c0_31, %c0_32] : memref<9x4x32xbf16, #tpu.memory_space<vmem>>, vector<1x4x32xbf16>
    %25 = vector.shape_cast %24 : vector<1x4x32xbf16> to vector<4x32xbf16>
    %cst_33 = arith.constant dense<0.000000e+00> : vector<56x32xf32>
    %26 = tpu.matmul %23, %25, %cst_33 {dimension_numbers = #tpu.dot_dimension_numbers<[1], [0], [0], [1], [0, 0, 1, 1], [], []>} : vector<56x4xbf16>, vector<4x32xbf16>, vector<56x32xf32> -> vector<56x32xf32>
    %27 = arith.addf %21, %26 : vector<56x32xf32>
    %c0_34 = arith.constant 0 : index
    %c3_35 = arith.constant 3 : index
    %c0_36 = arith.constant 0 : index
    %c0_37 = arith.constant 0 : index
    %28 = vector.load %arg1[%c0_34, %c3_35, %c0_36, %c0_37] : memref<1x4x72x4xbf16, #tpu.memory_space<vmem>>, vector<1x1x56x4xbf16>
    %29 = vector.shape_cast %28 : vector<1x1x56x4xbf16> to vector<56x4xbf16>
    %c4 = arith.constant 4 : index
    %c0_38 = arith.constant 0 : index
    %c0_39 = arith.constant 0 : index
    %30 = vector.load %arg2[%c4, %c0_38, %c0_39] : memref<9x4x32xbf16, #tpu.memory_space<vmem>>, vector<1x4x32xbf16>
    %31 = vector.shape_cast %30 : vector<1x4x32xbf16> to vector<4x32xbf16>
    %cst_40 = arith.constant dense<0.000000e+00> : vector<56x32xf32>
    %32 = tpu.matmul %29, %31, %cst_40 {dimension_numbers = #tpu.dot_dimension_numbers<[1], [0], [0], [1], [0, 0, 1, 1], [], []>} : vector<56x4xbf16>, vector<4x32xbf16>, vector<56x32xf32> -> vector<56x32xf32>
    %33 = arith.addf %27, %32 : vector<56x32xf32>
    %c0_41 = arith.constant 0 : index
    %c2_42 = arith.constant 2 : index
    %c1_43 = arith.constant 1 : index
    %c0_44 = arith.constant 0 : index
    %34 = vector.load %arg1[%c0_41, %c2_42, %c1_43, %c0_44] : memref<1x4x72x4xbf16, #tpu.memory_space<vmem>>, vector<1x1x56x4xbf16>
    %35 = vector.shape_cast %34 : vector<1x1x56x4xbf16> to vector<56x4xbf16>
    %c5 = arith.constant 5 : index
    %c0_45 = arith.constant 0 : index
    %c0_46 = arith.constant 0 : index
    %36 = vector.load %arg2[%c5, %c0_45, %c0_46] : memref<9x4x32xbf16, #tpu.memory_space<vmem>>, vector<1x4x32xbf16>
    %37 = vector.shape_cast %36 : vector<1x4x32xbf16> to vector<4x32xbf16>
    %cst_47 = arith.constant dense<0.000000e+00> : vector<56x32xf32>
    %38 = tpu.matmul %35, %37, %cst_47 {dimension_numbers = #tpu.dot_dimension_numbers<[1], [0], [0], [1], [0, 0, 1, 1], [], []>} : vector<56x4xbf16>, vector<4x32xbf16>, vector<56x32xf32> -> vector<56x32xf32>
    %39 = arith.addf %33, %38 : vector<56x32xf32>
    %c0_48 = arith.constant 0 : index
    %c0_49 = arith.constant 0 : index
    %c8 = arith.constant 8 : index
    %c0_50 = arith.constant 0 : index
    %40 = vector.load %arg1[%c0_48, %c0_49, %c8, %c0_50] : memref<1x4x72x4xbf16, #tpu.memory_space<vmem>>, vector<1x1x56x4xbf16>
    %41 = vector.shape_cast %40 : vector<1x1x56x4xbf16> to vector<56x4xbf16>
    %c6 = arith.constant 6 : index
    %c0_51 = arith.constant 0 : index
    %c0_52 = arith.constant 0 : index
    %42 = vector.load %arg2[%c6, %c0_51, %c0_52] : memref<9x4x32xbf16, #tpu.memory_space<vmem>>, vector<1x4x32xbf16>
    %43 = vector.shape_cast %42 : vector<1x4x32xbf16> to vector<4x32xbf16>
    %cst_53 = arith.constant dense<0.000000e+00> : vector<56x32xf32>
    %44 = tpu.matmul %41, %43, %cst_53 {dimension_numbers = #tpu.dot_dimension_numbers<[1], [0], [0], [1], [0, 0, 1, 1], [], []>} : vector<56x4xbf16>, vector<4x32xbf16>, vector<56x32xf32> -> vector<56x32xf32>
    %45 = arith.addf %39, %44 : vector<56x32xf32>
    %c0_54 = arith.constant 0 : index
    %c1_55 = arith.constant 1 : index
    %c8_56 = arith.constant 8 : index
    %c0_57 = arith.constant 0 : index
    %46 = vector.load %arg1[%c0_54, %c1_55, %c8_56, %c0_57] : memref<1x4x72x4xbf16, #tpu.memory_space<vmem>>, vector<1x1x56x4xbf16>
    %47 = vector.shape_cast %46 : vector<1x1x56x4xbf16> to vector<56x4xbf16>
    %c7 = arith.constant 7 : index
    %c0_58 = arith.constant 0 : index
    %c0_59 = arith.constant 0 : index
    %48 = vector.load %arg2[%c7, %c0_58, %c0_59] : memref<9x4x32xbf16, #tpu.memory_space<vmem>>, vector<1x4x32xbf16>
    %49 = vector.shape_cast %48 : vector<1x4x32xbf16> to vector<4x32xbf16>
    %cst_60 = arith.constant dense<0.000000e+00> : vector<56x32xf32>
    %50 = tpu.matmul %47, %49, %cst_60 {dimension_numbers = #tpu.dot_dimension_numbers<[1], [0], [0], [1], [0, 0, 1, 1], [], []>} : vector<56x4xbf16>, vector<4x32xbf16>, vector<56x32xf32> -> vector<56x32xf32>
    %51 = arith.addf %45, %50 : vector<56x32xf32>
    %c0_61 = arith.constant 0 : index
    %c0_62 = arith.constant 0 : index
    %c9 = arith.constant 9 : index
    %c0_63 = arith.constant 0 : index
    %52 = vector.load %arg1[%c0_61, %c0_62, %c9, %c0_63] : memref<1x4x72x4xbf16, #tpu.memory_space<vmem>>, vector<1x1x56x4xbf16>
    %53 = vector.shape_cast %52 : vector<1x1x56x4xbf16> to vector<56x4xbf16>
    %c8_64 = arith.constant 8 : index
    %c0_65 = arith.constant 0 : index
    %c0_66 = arith.constant 0 : index
    %54 = vector.load %arg2[%c8_64, %c0_65, %c0_66] : memref<9x4x32xbf16, #tpu.memory_space<vmem>>, vector<1x4x32xbf16>
    %55 = vector.shape_cast %54 : vector<1x4x32xbf16> to vector<4x32xbf16>
    %cst_67 = arith.constant dense<0.000000e+00> : vector<56x32xf32>
    %56 = tpu.matmul %53, %55, %cst_67 {dimension_numbers = #tpu.dot_dimension_numbers<[1], [0], [0], [1], [0, 0, 1, 1], [], []>} : vector<56x4xbf16>, vector<4x32xbf16>, vector<56x32xf32> -> vector<56x32xf32>
    %57 = arith.addf %51, %56 : vector<56x32xf32>
    %58 = vector.broadcast %0 : vector<1x32xf32> to vector<56x32xf32>
    %59 = arith.mulf %57, %58 : vector<56x32xf32>
    %60 = vector.broadcast %1 : vector<1x32xf32> to vector<56x32xf32>
    %61 = arith.addf %59, %60 : vector<56x32xf32>
    %cst_68 = arith.constant 0.000000e+00 : f32
    %62 = vector.broadcast %cst_68 : f32 to vector<56x32xf32>
    %63 = arith.maximumf %61, %62 : vector<56x32xf32>
    %64 = tpu.transpose %63, [1, 0] : vector<56x32xf32> -> vector<32x56xf32>
    %cst_69 = arith.constant dense<0.000000e+00> : vector<32x49xf32>
    %65 = tpu.matmul %64, %2, %cst_69 {dimension_numbers = #tpu.dot_dimension_numbers<[1], [0], [0], [1], [0, 0, 1, 1], [], []>} : vector<32x56xf32>, vector<56x49xf32>, vector<32x49xf32> -> vector<32x49xf32>
    %c0_70 = arith.constant 0 : index
    %c0_71 = arith.constant 0 : index
    %c0_72 = arith.constant 0 : index
    %66 = vector.load %arg6[%c0_70, %c0_71, %c0_72] : memref<1x32x49xf32, #tpu.memory_space<vmem>>, vector<1x32x49xf32>
    %67 = vector.shape_cast %66 : vector<1x32x49xf32> to vector<32x49xf32>
    %68 = vector.shape_cast %65 : vector<32x49xf32> to vector<1x32x49xf32>
    tpu.vector_store %arg6[%c0_70, %c0_71, %c0_72], %68 {strides = array<i32>} : memref<1x32x49xf32, #tpu.memory_space<vmem>>, vector<1x32x49xf32>,
    return
  }
  func.func @transform_0(%arg0: i32) -> (i32, i32, i32, i32) {
    %c0_i32 = arith.constant 0 : i32
    %c0_i32_0 = arith.constant 0 : i32
    %c0_i32_1 = arith.constant 0 : i32
    %c0_i32_2 = arith.constant 0 : i32
    return %arg0, %c0_i32, %c0_i32_0, %c0_i32_1 : i32, i32, i32, i32
  }
  func.func @transform_1(%arg0: i32) -> (i32, i32, i32) {
    %c0_i32 = arith.constant 0 : i32
    %c0_i32_0 = arith.constant 0 : i32
    %c0_i32_1 = arith.constant 0 : i32
    %c0_i32_2 = arith.constant 0 : i32
    return %c0_i32, %c0_i32_0, %c0_i32_1 : i32, i32, i32
  }
  func.func @transform_2(%arg0: i32) -> (i32, i32) {
    %c0_i32 = arith.constant 0 : i32
    %c0_i32_0 = arith.constant 0 : i32
    %c0_i32_1 = arith.constant 0 : i32
    return %c0_i32, %c0_i32_0 : i32, i32
  }
  func.func @transform_3(%arg0: i32) -> (i32, i32) {
    %c0_i32 = arith.constant 0 : i32
    %c0_i32_0 = arith.constant 0 : i32
    %c0_i32_1 = arith.constant 0 : i32
    return %c0_i32, %c0_i32_0 : i32, i32
  }
  func.func @transform_4(%arg0: i32) -> (i32, i32) {
    %c0_i32 = arith.constant 0 : i32
    %c0_i32_0 = arith.constant 0 : i32
    %c0_i32_1 = arith.constant 0 : i32
    return %c0_i32, %c0_i32_0 : i32, i32
  }
  func.func @transform_5(%arg0: i32) -> (i32, i32, i32) {
    %c0_i32 = arith.constant 0 : i32
    %c0_i32_0 = arith.constant 0 : i32
    %c0_i32_1 = arith.constant 0 : i32
    return %arg0, %c0_i32, %c0_i32_0 : i32, i32, i32
  }
}

</mosaic_0001>

<llo_original>
// kernel: primary_caps_forward.3
$region0: #{primary_caps_forward.3}
  #allocation0 [shape = 'u32[]', space=smem, size = 0x4, offset = 0x4, fixed_abs, tag = 'smem constant byte address 0x4 - core index']
  #allocation1 [shape = 'u32[144,128]{1,0:T(1,128)}', space=vmem, size = 0x12000, scoped, tag = 'internal scratch']
  %s0 = inlined_call_operand.vmem [shape: f32[32,128], index: 0, kind: input, shape index: {}]
  %s1 = inlined_call_operand.vmem [shape: bf16[128,128], index: 1, kind: input, shape index: {}]
  %s2 = inlined_call_operand.vmem [shape: f32[32,128], index: 2, kind: output, shape index: {}]
  %s3 = sld [smem:[#allocation0]]
  $region41: #{primary_caps_forward.3} parent=0
    _
  %s5 = ssub.s32 1, %s3
  %s6 = scalar_select 0, %s5, %s3
  loop: start=0, step=1, limit=4
  $region2: #{primary_caps_forward.3} parent=0 // loop_pre_header
    _
  $region3: #{primary_caps_forward.3} parent=0 // loop_header
    %s8 = sphi 0, %s12
    %p9 = scmp.ge.s32.totalorder %s8, 4
    %s18 = sphi 0, %s20
    %s21 = sphi 0, %s18
    %s22 = sphi 0, %s21
    %s38 = sphi 0, %s22
    %s42 = sphi 0, %s42
    %s44 = sphi 0, %s42
    %s45 = sphi 0, %s44
    %s59 = sphi 0, %s45
    %s65 = sphi 0, %s67
    %s68 = sphi 0, %s65
    %s69 = sphi 0, %s68
    %s85 = sphi 0, %s69
  $region4: #{primary_caps_forward.3} parent=0 // loop_header_branch
    %11 = sbr.rel (%p9) target = $region8
  $region5: #{primary_caps_forward.3} parent=0 // loop_body
    %s13 = ssub.s32 %s8, 1
    %s14 = ssub.s32 %s8, 2
    %s15 = sadd.s32 %s8, 1
    %s16 = ssub.s32 %s8, %s15
    %p17 = scmp.eq.s32.totalorder %s16, 0
    %s19 = sadd.s32 %s18, 1
    %s20 = scalar_select %p17, %s18, %s19
    %p23 = pneg %p17
    %p24 = scmp.eq.s32.totalorder %s8, 1
    %p25 = por %p23, %p24
    %p26 = scmp.ne.s32.totalorder %s18, %s21
    %p27 = scmp.eq.s32.totalorder %s8, 0
    %p28 = por %p26, %p27
    %p29 = scmp.ne.s32.totalorder %s18, %s21
    %p30 = scmp.eq.s32.totalorder %s13, 1
    %p31 = por %p29, %p30
    %p32 = scmp.ne.s32.totalorder %s21, %s22
    %p33 = scmp.eq.s32.totalorder %s13, 0
    %p34 = por %p32, %p33
    %p35 = scmp.ne.s32.totalorder %s21, %s22
    %p36 = scmp.eq.s32.totalorder %s14, 1
    %p37 = por %p35, %p36
    %p39 = scmp.ne.s32.totalorder %s22, %s38
    %p40 = scmp.eq.s32.totalorder %s14, 0
    %p41 = por %p39, %p40
    %s43 = sadd.s32 %s42, 1
    %p46 = scmp.eq.s32.totalorder %s8, 1
    %p47 = scmp.ne.s32.totalorder %s42, %s44
    %p48 = scmp.eq.s32.totalorder %s8, 0
    %p49 = por %p47, %p48
    %p50 = scmp.ne.s32.totalorder %s42, %s44
    %p51 = scmp.eq.s32.totalorder %s13, 1
    %p52 = por %p50, %p51
    %p53 = scmp.ne.s32.totalorder %s44, %s45
    %p54 = scmp.eq.s32.totalorder %s13, 0
    %p55 = por %p53, %p54
    %p56 = scmp.ne.s32.totalorder %s44, %s45
    %p57 = scmp.eq.s32.totalorder %s14, 1
    %p58 = por %p56, %p57
    %p60 = scmp.ne.s32.totalorder %s45, %s59
    %p61 = scmp.eq.s32.totalorder %s14, 0
    %p62 = por %p60, %p61
    %s63 = ssub.s32 %s8, %s15
    %p64 = scmp.eq.s32.totalorder %s63, 0
    %s66 = sadd.s32 %s65, 1
    %s67 = scalar_select %p64, %s65, %s66
    %p70 = pneg %p64
    %p71 = scmp.eq.s32.totalorder %s8, 1
    %p72 = por %p70, %p71
    %p73 = scmp.ne.s32.totalorder %s65, %s68
    %p74 = scmp.eq.s32.totalorder %s8, 0
    %p75 = por %p73, %p74
    %p76 = scmp.ne.s32.totalorder %s65, %s68
    %p77 = scmp.eq.s32.totalorder %s13, 1
    %p78 = por %p76, %p77
    %p79 = scmp.ne.s32.totalorder %s68, %s69
    %p80 = scmp.eq.s32.totalorder %s13, 0
    %p81 = por %p79, %p80
    %p82 = scmp.ne.s32.totalorder %s68, %s69
    %p83 = scmp.eq.s32.totalorder %s14, 1
    %p84 = por %p82, %p83
    %p86 = scmp.ne.s32.totalorder %s69, %s85
    %p87 = scmp.eq.s32.totalorder %s14, 0
    %p88 = por %p86, %p87
    %p89 = scmp.le.s32.totalorder 1, %s8
    %p90 = scmp.lt.s32.totalorder %s8, 3
    %p91 = pnand %p89, %p90
    %p92 = pneg %p91
    // Predicated region
    $region9: #{primary_caps_forward.3} parent=5 // pred_check
      _
    $region10: #{primary_caps_forward.3} parent=5 // pred_check_branch
      %94 = sbr.rel (%p91) target = $region12
    $region11: #{primary_caps_forward.3} parent=5 // pred_region
      %s95 = ssub.s32 %s8, 1
      // Predicated region
      $region13: #{primary_caps_forward.3} parent=11 // pred_check
        %p96 = pneg %p55
      $region14: #{primary_caps_forward.3} parent=11 // pred_check_branch
        %98 = sbr.rel (%p96) target = $region16
      $region15: #{primary_caps_forward.3} parent=11 // pred_region
        _
      $region16: #{primary_caps_forward.3} parent=11 // pred_fallthru
        _
    $region12: #{primary_caps_forward.3} parent=5 // pred_fallthru
      _
    %p99 = scmp.lt.s32.totalorder %s8, 2
    // Predicated region
    $region17: #{primary_caps_forward.3} parent=5 // pred_check
      %p100 = pneg %p99
    $region18: #{primary_caps_forward.3} parent=5 // pred_check_branch
      %102 = sbr.rel (%p100) target = $region20
    $region19: #{primary_caps_forward.3} parent=5 // pred_region
      // Predicated region
      $region21: #{primary_caps_forward.3} parent=19 // pred_check
        %p103 = pneg %p28
      $region22: #{primary_caps_forward.3} parent=19 // pred_check_branch
        %105 = sbr.rel (%p103) target = $region24
      $region23: #{primary_caps_forward.3} parent=19 // pred_region
        %s106 = smul.u32 2, %s8
        %p107 = scmp.lt.s32.totalorder %s106, 3
        %s108 = scalar_select %p107, %s106, 3
        %s109 = smul.addr %s108, 8
        %s110 = scalar_lea.vmem %s0, %s109
        %s111 = smul.u32 2, %s8
      $region24: #{primary_caps_forward.3} parent=19 // pred_fallthru
        _
    $region20: #{primary_caps_forward.3} parent=5 // pred_fallthru
      _
    %p112 = scmp.le.s32.totalorder 1, %s8
    %p113 = scmp.lt.s32.totalorder %s8, 3
    %p114 = pnand %p112, %p113
    %p115 = pneg %p114
    // Predicated region
    $region25: #{primary_caps_forward.3} parent=5 // pred_check
      _
    $region26: #{primary_caps_forward.3} parent=5 // pred_check_branch
      %117 = sbr.rel (%p114) target = $region28
    $region27: #{primary_caps_forward.3} parent=5 // pred_region
      %s118 = ssub.s32 %s8, 1
      %s119 = smul.u32 2, %s13
      %p120 = scmp.lt.s32.totalorder %s119, 3
      %s121 = scalar_select %p120, %s119, 3
      %s122 = smul.addr %s121, 8
      %s123 = scalar_lea.vmem %s0, %s122
      %p124 = pneg %p34
      %p125 = pneg %p31
      %p126 = pneg %p55
      %p127 = pneg %p52
      %p128 = pneg %p81
      %p129 = pneg %p78
      %s130 = smul.u32 2, %s13
      %p131 = scmp.lt.s32.totalorder %s130, 3
      %s132 = scalar_select %p131, %s130, 3
      %s133 = smul.addr %s132, 8
      %s134 = scalar_lea.vmem %s2, %s133
      %s135 = smul.u32 2, %s13
      %p136 = scmp.lt.s32.totalorder %s135, 3
      %s137 = scalar_select %p136, %s135, 3
      %s138 = smul.addr %s137, 8
      %s139 = scalar_lea.vmem %s0, %s138
      %s140 = smul.u32 2, %s13
      %s141 = smul.u32 2, %s13
      %p142 = scmp.lt.s32.totalorder %s141, 3
      %s143 = scalar_select %p142, %s141, 3
      %s144 = smul.addr %s143, 8
      %s145 = scalar_lea.vmem %s2, %s144
      %s146 = smul.u32 2, %s13
      %v148 = vld [vmem:[%s139] sm:$0xff]
      %v149 = vld [vmem:[%s139 + $0x8] sm:$0xff]
      %v150 = vpack.c.bf16 %v149, %v148
      %v151 = vmul.bf16 %v150, %v150
      %v152 = vld [vmem:[%s1] sm:$0xf]
      %v153 = vld [vmem:[%s1 + $0x4] sm:$0xf]
      %v154 = vld [vmem:[%s1 + $0x8] sm:$0xf]
      %v155 = vld [vmem:[%s1 + $0xc] sm:$0xf]
      %v156 = vld [vmem:[%s1 + $0x10] sm:$0xf]
      %v157 = vld [vmem:[%s1 + $0x14] sm:$0xf]
      %v158 = vld [vmem:[%s1 + $0x18] sm:$0xf]
      %v159 = vld [vmem:[%s1 + $0x1c] sm:$0xf]
      %v160 = vld [vmem:[%s1 + $0x20] sm:$0xf]
      %v161 = vld [vmem:[%s1 + $0x24] sm:$0xf]
      %v162 = vld [vmem:[%s1 + $0x28] sm:$0xf]
      %v163 = vld [vmem:[%s1 + $0x2c] sm:$0xf]
      %v164 = vld [vmem:[%s1 + $0x30] sm:$0xf]
      %v165 = vld [vmem:[%s1 + $0x34] sm:$0xf]
      %v166 = vld [vmem:[%s1 + $0x38] sm:$0xf]
      %v167 = vld [vmem:[%s1 + $0x3c] sm:$0xf]
      %v184 = vunpack.c.l.b16 %v152
      %v185 = vunpack.c.l.b16 %v153
      %v186 = vunpack.c.l.b16 %v154
      %v187 = vunpack.c.l.b16 %v155
      %v188 = vunpack.c.l.b16 %v156
      %v189 = vunpack.c.l.b16 %v157
      %v190 = vunpack.c.l.b16 %v158
      %v191 = vunpack.c.l.b16 %v159
      %v192 = vunpack.c.l.b16 %v160
      %v193 = vunpack.c.l.b16 %v161
      %v194 = vunpack.c.l.b16 %v162
      %v195 = vunpack.c.l.b16 %v163
      %v196 = vunpack.c.l.b16 %v164
      %v197 = vunpack.c.l.b16 %v165
      %v198 = vunpack.c.l.b16 %v166
      %v199 = vunpack.c.l.b16 %v167
      %v200 = vpack.c.b16 %v185, %v184
      %v201 = vpack.c.b16 %v187, %v186
      %v202 = vpack.c.b16 %v189, %v188
      %v203 = vpack.c.b16 %v191, %v190
      %v204 = vpack.c.b16 %v193, %v192
      %v205 = vpack.c.b16 %v195, %v194
      %v206 = vpack.c.b16 %v197, %v196
      %v207 = vpack.c.b16 %v199, %v198
      %216 = vmatprep.subr.bf16.mxu0 0
      %217 = vmatpush1.bf16.msra.mxu0 %v200
      %218 = vmatprep.subr.bf16.mxu0 0
      %219 = vmatpush1.bf16.msra.mxu0 %v201
      %220 = vmatprep.subr.bf16.mxu0 0
      %221 = vmatpush1.bf16.msra.mxu0 %v202
      %222 = vmatprep.subr.bf16.mxu0 0
      %223 = vmatpush1.bf16.msra.mxu0 %v203
      %224 = vmatprep.subr.bf16.mxu0 0
      %225 = vmatpush1.bf16.msra.mxu0 %v204
      %226 = vmatprep.subr.bf16.mxu0 0
      %227 = vmatpush1.bf16.msra.mxu0 %v205
      %228 = vmatprep.subr.bf16.mxu0 0
      %229 = vmatpush1.bf16.msra.mxu0 %v206
      %230 = vmatprep.subr.bf16.mxu0 0
      %231 = vmatpush1.bf16.msra.mxu0 %v207
      %232 = vmatprep.subr.bf16.mxu0 0
      %233 = vmatpush1.bf16.msra.mxu0 0
      %234 = vmatprep.subr.bf16.mxu0 0
      %235 = vmatpush1.bf16.msra.mxu0 0
      %236 = vmatprep.subr.bf16.mxu0 0
      %237 = vmatpush1.bf16.msra.mxu0 0
      %238 = vmatprep.subr.bf16.mxu0 0
      %239 = vmatpush1.bf16.msra.mxu0 0
      %240 = vmatprep.subr.bf16.mxu0 0
      %241 = vmatpush1.bf16.msra.mxu0 0
      %242 = vmatprep.subr.bf16.mxu0 0
      %243 = vmatpush1.bf16.msra.mxu0 0
      %244 = vmatprep.subr.bf16.mxu0 0
      %245 = vmatpush1.bf16.msra.mxu0 0
      %246 = vmatprep.subr.bf16.mxu0 0
      %247 = vmatpush1.bf16.msra.mxu0 0
      %248 = vmatprep.mubr.bf16.mxu0 0
      %249 = vmatmul.mubr.bf16.gmra.mrb[0].mxu0 %v151
      %v250 = vpop.f32.mrb[0].mxu0
      %v251 = vadd.f32 0.0, %v250
      %v252 = vpop.f32.mrb[0].mxu0
      %v253 = vpop.f32.mrb[0].mxu0
      %v254 = vadd.f32 0.0, %v253
      %v255 = vpop.f32.mrb[0].mxu0
      %256 = vdwg.mxu0
      %v257 = vadd.f32 %v251, 1.0
      %v258 = vadd.f32 %v254, 1.0
      %v259 = vrsqrt.pop %v251
      %v260 = vmul.f32 %v251, %v259
      %vm261 = vcmp.eq.f32.partialorder %v251, inf
      %v262 = vsel %vm261, %v251, %v260
      %vm263 = vcmp.eq.f32.partialorder %v251, 0.0
      %v264 = vand.u32 %v251, 2147483648
      %v265 = vsel %vm263, %v264, %v262
      %v266 = vrsqrt.pop %v254
      %v267 = vmul.f32 %v254, %v266
      %vm268 = vcmp.eq.f32.partialorder %v254, inf
      %v269 = vsel %vm268, %v254, %v267
      %vm270 = vcmp.eq.f32.partialorder %v254, 0.0
      %v271 = vand.u32 %v254, 2147483648
      %v272 = vsel %vm270, %v271, %v269
      %v273 = vadd.f32 %v265, 1e-08
      %v274 = vadd.f32 %v272, 1e-08
      %v275 = vmul.f32 %v257, %v273
      %v276 = vmul.f32 %v258, %v274
      %v277 = vmul.f32 %v148, %v251
      %v278 = vmul.f32 %v149, %v254
      %v279 = vrcp.pop %v275
      %v280 = vrcp.pop %v276
      %v281 = vmul.f32 %v277, %v279
      %v282 = vmul.f32 %v278, %v280
      %283 = vst [vmem:[%s145] sm:$0xff] %v281
      %284 = vst [vmem:[%s145 + $0x8] sm:$0xff] %v282
      %s285 = smul.u32 2, %s13
      %p286 = scmp.lt.s32.totalorder %s285, 3
      %s287 = scalar_select %p286, %s285, 3
      %s288 = smul.addr %s287, 8
      %s289 = scalar_lea.vmem %s2, %s288
      // Predicated region
      $region29: #{primary_caps_forward.3} parent=27 // pred_check
        %p290 = pneg %p78
      $region30: #{primary_caps_forward.3} parent=27 // pred_check_branch
        %292 = sbr.rel (%p290) target = $region32
      $region31: #{primary_caps_forward.3} parent=27 // pred_region
        %s293 = smul.u32 2, %s13
      $region32: #{primary_caps_forward.3} parent=27 // pred_fallthru
        _
    $region28: #{primary_caps_forward.3} parent=5 // pred_fallthru
      _
    %p294 = scmp.le.s32.totalorder 2, %s8
    // Predicated region
    $region33: #{primary_caps_forward.3} parent=5 // pred_check
      %p295 = pneg %p294
    $region34: #{primary_caps_forward.3} parent=5 // pred_check_branch
      %297 = sbr.rel (%p295) target = $region36
    $region35: #{primary_caps_forward.3} parent=5 // pred_region
      %s298 = ssub.s32 %s8, 2
      // Predicated region
      $region37: #{primary_caps_forward.3} parent=35 // pred_check
        %p299 = pneg %p84
      $region38: #{primary_caps_forward.3} parent=35 // pred_check_branch
        %301 = sbr.rel (%p299) target = $region40
      $region39: #{primary_caps_forward.3} parent=35 // pred_region
        %s302 = smul.u32 2, %s14
        %p303 = scmp.lt.s32.totalorder %s302, 3
        %s304 = scalar_select %p303, %s302, 3
        %s305 = smul.addr %s304, 8
        %s306 = scalar_lea.vmem %s2, %s305
      $region40: #{primary_caps_forward.3} parent=35 // pred_fallthru
        _
    $region36: #{primary_caps_forward.3} parent=5 // pred_fallthru
      _
  $region6: #{primary_caps_forward.3} parent=0 // loop_footer
    %s12 = sadd.s32 1, %s8
  $region7: #{primary_caps_forward.3} parent=0 // loop_footer_branch
    %7 = sbr.rel target = $region3
  $region8: #{primary_caps_forward.3} parent=0 // loop_exit
    _

// kernel: primary_caps_forward.2
$region0: #{primary_caps_forward.2}
  #allocation0 [shape = 'u32[]', space=smem, size = 0x4, offset = 0x4, fixed_abs, tag = 'smem constant byte address 0x4 - core index']
  #allocation1 [shape = 'u32[144,128]{1,0:T(1,128)}', space=vmem, size = 0x12000, scoped, tag = 'internal scratch']
  %s0 = inlined_call_operand.vmem [shape: bf16[2,4,72,4], index: 0, kind: input, shape index: {}]
  %s1 = inlined_call_operand.vmem [shape: bf16[9,4,32], index: 1, kind: input, shape index: {}]
  %s2 = inlined_call_operand.vmem [shape: f32[1,32], index: 2, kind: input, shape index: {}]
  %s3 = inlined_call_operand.vmem [shape: f32[1,32], index: 3, kind: input, shape index: {}]
  %s4 = inlined_call_operand.vmem [shape: f32[56,49], index: 4, kind: input, shape index: {}]
  %s5 = inlined_call_operand.vmem [shape: f32[2,32,49], index: 5, kind: output, shape index: {}]
  %s6 = sld [smem:[#allocation0]]
  $region53: #{primary_caps_forward.2} parent=0
    _
  %s8 = ssub.s32 1, %s6
  %s9 = scalar_select 0, %s8, %s6
  loop: start=0, step=1, limit=4
  $region2: #{primary_caps_forward.2} parent=0 // loop_pre_header
    _
  $region3: #{primary_caps_forward.2} parent=0 // loop_header
    %s11 = sphi 0, %s15
    %p12 = scmp.ge.s32.totalorder %s11, 4
    %s21 = sphi 0, %s23
    %s24 = sphi 0, %s21
    %s25 = sphi 0, %s24
    %s41 = sphi 0, %s25
    %s45 = sphi 0, %s45
    %s47 = sphi 0, %s45
    %s48 = sphi 0, %s47
    %s62 = sphi 0, %s48
    %s66 = sphi 0, %s66
    %s68 = sphi 0, %s66
    %s69 = sphi 0, %s68
    %s83 = sphi 0, %s69
    %s87 = sphi 0, %s87
    %s89 = sphi 0, %s87
    %s90 = sphi 0, %s89
    %s104 = sphi 0, %s90
    %s108 = sphi 0, %s108
    %s110 = sphi 0, %s108
    %s111 = sphi 0, %s110
    %s125 = sphi 0, %s111
    %s131 = sphi 0, %s133
    %s134 = sphi 0, %s131
    %s135 = sphi 0, %s134
    %s151 = sphi 0, %s135
  $region4: #{primary_caps_forward.2} parent=0 // loop_header_branch
    %14 = sbr.rel (%p12) target = $region8
  $region5: #{primary_caps_forward.2} parent=0 // loop_body
    %s16 = ssub.s32 %s11, 1
    %s17 = ssub.s32 %s11, 2
    %s18 = sadd.s32 %s11, 1
    %s19 = ssub.s32 %s11, %s18
    %p20 = scmp.eq.s32.totalorder %s19, 0
    %s22 = sadd.s32 %s21, 1
    %s23 = scalar_select %p20, %s21, %s22
    %p26 = pneg %p20
    %p27 = scmp.eq.s32.totalorder %s11, 1
    %p28 = por %p26, %p27
    %p29 = scmp.ne.s32.totalorder %s21, %s24
    %p30 = scmp.eq.s32.totalorder %s11, 0
    %p31 = por %p29, %p30
    %p32 = scmp.ne.s32.totalorder %s21, %s24
    %p33 = scmp.eq.s32.totalorder %s16, 1
    %p34 = por %p32, %p33
    %p35 = scmp.ne.s32.totalorder %s24, %s25
    %p36 = scmp.eq.s32.totalorder %s16, 0
    %p37 = por %p35, %p36
    %p38 = scmp.ne.s32.totalorder %s24, %s25
    %p39 = scmp.eq.s32.totalorder %s17, 1
    %p40 = por %p38, %p39
    %p42 = scmp.ne.s32.totalorder %s25, %s41
    %p43 = scmp.eq.s32.totalorder %s17, 0
    %p44 = por %p42, %p43
    %s46 = sadd.s32 %s45, 1
    %p49 = scmp.eq.s32.totalorder %s11, 1
    %p50 = scmp.ne.s32.totalorder %s45, %s47
    %p51 = scmp.eq.s32.totalorder %s11, 0
    %p52 = por %p50, %p51
    %p53 = scmp.ne.s32.totalorder %s45, %s47
    %p54 = scmp.eq.s32.totalorder %s16, 1
    %p55 = por %p53, %p54
    %p56 = scmp.ne.s32.totalorder %s47, %s48
    %p57 = scmp.eq.s32.totalorder %s16, 0
    %p58 = por %p56, %p57
    %p59 = scmp.ne.s32.totalorder %s47, %s48
    %p60 = scmp.eq.s32.totalorder %s17, 1
    %p61 = por %p59, %p60
    %p63 = scmp.ne.s32.totalorder %s48, %s62
    %p64 = scmp.eq.s32.totalorder %s17, 0
    %p65 = por %p63, %p64
    %s67 = sadd.s32 %s66, 1
    %p70 = scmp.eq.s32.totalorder %s11, 1
    %p71 = scmp.ne.s32.totalorder %s66, %s68
    %p72 = scmp.eq.s32.totalorder %s11, 0
    %p73 = por %p71, %p72
    %p74 = scmp.ne.s32.totalorder %s66, %s68
    %p75 = scmp.eq.s32.totalorder %s16, 1
    %p76 = por %p74, %p75
    %p77 = scmp.ne.s32.totalorder %s68, %s69
    %p78 = scmp.eq.s32.totalorder %s16, 0
    %p79 = por %p77, %p78
    %p80 = scmp.ne.s32.totalorder %s68, %s69
    %p81 = scmp.eq.s32.totalorder %s17, 1
    %p82 = por %p80, %p81
    %p84 = scmp.ne.s32.totalorder %s69, %s83
    %p85 = scmp.eq.s32.totalorder %s17, 0
    %p86 = por %p84, %p85
    %s88 = sadd.s32 %s87, 1
    %p91 = scmp.eq.s32.totalorder %s11, 1
    %p92 = scmp.ne.s32.totalorder %s87, %s89
    %p93 = scmp.eq.s32.totalorder %s11, 0
    %p94 = por %p92, %p93
    %p95 = scmp.ne.s32.totalorder %s87, %s89
    %p96 = scmp.eq.s32.totalorder %s16, 1
    %p97 = por %p95, %p96
    %p98 = scmp.ne.s32.totalorder %s89, %s90
    %p99 = scmp.eq.s32.totalorder %s16, 0
    %p100 = por %p98, %p99
    %p101 = scmp.ne.s32.totalorder %s89, %s90
    %p102 = scmp.eq.s32.totalorder %s17, 1
    %p103 = por %p101, %p102
    %p105 = scmp.ne.s32.totalorder %s90, %s104
    %p106 = scmp.eq.s32.totalorder %s17, 0
    %p107 = por %p105, %p106
    %s109 = sadd.s32 %s108, 1
    %p112 = scmp.eq.s32.totalorder %s11, 1
    %p113 = scmp.ne.s32.totalorder %s108, %s110
    %p114 = scmp.eq.s32.totalorder %s11, 0
    %p115 = por %p113, %p114
    %p116 = scmp.ne.s32.totalorder %s108, %s110
    %p117 = scmp.eq.s32.totalorder %s16, 1
    %p118 = por %p116, %p117
    %p119 = scmp.ne.s32.totalorder %s110, %s111
    %p120 = scmp.eq.s32.totalorder %s16, 0
    %p121 = por %p119, %p120
    %p122 = scmp.ne.s32.totalorder %s110, %s111
    %p123 = scmp.eq.s32.totalorder %s17, 1
    %p124 = por %p122, %p123
    %p126 = scmp.ne.s32.totalorder %s111, %s125
    %p127 = scmp.eq.s32.totalorder %s17, 0
    %p128 = por %p126, %p127
    %s129 = ssub.s32 %s11, %s18
    %p130 = scmp.eq.s32.totalorder %s129, 0
    %s132 = sadd.s32 %s131, 1
    %s133 = scalar_select %p130, %s131, %s132
    %p136 = pneg %p130
    %p137 = scmp.eq.s32.totalorder %s11, 1
    %p138 = por %p136, %p137
    %p139 = scmp.ne.s32.totalorder %s131, %s134
    %p140 = scmp.eq.s32.totalorder %s11, 0
    %p141 = por %p139, %p140
    %p142 = scmp.ne.s32.totalorder %s131, %s134
    %p143 = scmp.eq.s32.totalorder %s16, 1
    %p144 = por %p142, %p143
    %p145 = scmp.ne.s32.totalorder %s134, %s135
    %p146 = scmp.eq.s32.totalorder %s16, 0
    %p147 = por %p145, %p146
    %p148 = scmp.ne.s32.totalorder %s134, %s135
    %p149 = scmp.eq.s32.totalorder %s17, 1
    %p150 = por %p148, %p149
    %p152 = scmp.ne.s32.totalorder %s135, %s151
    %p153 = scmp.eq.s32.totalorder %s17, 0
    %p154 = por %p152, %p153
    %p155 = scmp.le.s32.totalorder 1, %s11
    %p156 = scmp.lt.s32.totalorder %s11, 3
    %p157 = pnand %p155, %p156
    %p158 = pneg %p157
    // Predicated region
    $region9: #{primary_caps_forward.2} parent=5 // pred_check
      _
    $region10: #{primary_caps_forward.2} parent=5 // pred_check_branch
      %160 = sbr.rel (%p157) target = $region12
    $region11: #{primary_caps_forward.2} parent=5 // pred_region
      %s161 = ssub.s32 %s11, 1
      // Predicated region
      $region13: #{primary_caps_forward.2} parent=11 // pred_check
        %p162 = pneg %p58
      $region14: #{primary_caps_forward.2} parent=11 // pred_check_branch
        %164 = sbr.rel (%p162) target = $region16
      $region15: #{primary_caps_forward.2} parent=11 // pred_region
        _
      $region16: #{primary_caps_forward.2} parent=11 // pred_fallthru
        _
      // Predicated region
      $region17: #{primary_caps_forward.2} parent=11 // pred_check
        %p165 = pneg %p79
      $region18: #{primary_caps_forward.2} parent=11 // pred_check_branch
        %167 = sbr.rel (%p165) target = $region20
      $region19: #{primary_caps_forward.2} parent=11 // pred_region
        _
      $region20: #{primary_caps_forward.2} parent=11 // pred_fallthru
        _
      // Predicated region
      $region21: #{primary_caps_forward.2} parent=11 // pred_check
        %p168 = pneg %p100
      $region22: #{primary_caps_forward.2} parent=11 // pred_check_branch
        %170 = sbr.rel (%p168) target = $region24
      $region23: #{primary_caps_forward.2} parent=11 // pred_region
        _
      $region24: #{primary_caps_forward.2} parent=11 // pred_fallthru
        _
      // Predicated region
      $region25: #{primary_caps_forward.2} parent=11 // pred_check
        %p171 = pneg %p121
      $region26: #{primary_caps_forward.2} parent=11 // pred_check_branch
        %173 = sbr.rel (%p171) target = $region28
      $region27: #{primary_caps_forward.2} parent=11 // pred_region
        _
      $region28: #{primary_caps_forward.2} parent=11 // pred_fallthru
        _
    $region12: #{primary_caps_forward.2} parent=5 // pred_fallthru
      _
    %p174 = scmp.lt.s32.totalorder %s11, 2
    // Predicated region
    $region29: #{primary_caps_forward.2} parent=5 // pred_check
      %p175 = pneg %p174
    $region30: #{primary_caps_forward.2} parent=5 // pred_check_branch
      %177 = sbr.rel (%p175) target = $region32
    $region31: #{primary_caps_forward.2} parent=5 // pred_region
      // Predicated region
      $region33: #{primary_caps_forward.2} parent=31 // pred_check
        %p178 = pneg %p31
      $region34: #{primary_caps_forward.2} parent=31 // pred_check_branch
        %180 = sbr.rel (%p178) target = $region36
      $region35: #{primary_caps_forward.2} parent=31 // pred_region
        %p181 = scmp.lt.s32.totalorder %s11, 1
        %s182 = scalar_select %p181, %s11, 1
        %s183 = smul.addr %s182, 36
        %s184 = smul.addr %s183, 4
        %s185 = scalar_lea.vmem %s0, %s184
      $region36: #{primary_caps_forward.2} parent=31 // pred_fallthru
        _
    $region32: #{primary_caps_forward.2} parent=5 // pred_fallthru
      _
    %p186 = scmp.le.s32.totalorder 1, %s11
    %p187 = scmp.lt.s32.totalorder %s11, 3
    %p188 = pnand %p186, %p187
    %p189 = pneg %p188
    // Predicated region
    $region37: #{primary_caps_forward.2} parent=5 // pred_check
      _
    $region38: #{primary_caps_forward.2} parent=5 // pred_check_branch
      %191 = sbr.rel (%p188) target = $region40
    $region39: #{primary_caps_forward.2} parent=5 // pred_region
      %s192 = ssub.s32 %s11, 1
      %p193 = scmp.lt.s32.totalorder %s16, 1
      %s194 = scalar_select %p193, %s16, 1
      %s195 = smul.addr %s194, 36
      %s196 = smul.addr %s195, 4
      %s197 = scalar_lea.vmem %s0, %s196
      %p198 = pneg %p37
      %p199 = pneg %p34
      %p200 = pneg %p58
      %p201 = pneg %p55
      %p202 = pneg %p79
      %p203 = pneg %p76
      %p204 = pneg %p100
      %p205 = pneg %p97
      %p206 = pneg %p121
      %p207 = pneg %p118
      %p208 = pneg %p147
      %p209 = pneg %p144
      %p210 = scmp.lt.s32.totalorder %s16, 1
      %s211 = scalar_select %p210, %s16, 1
      %s212 = smul.addr %s211, 4
      %s213 = smul.addr %s212, 8
      %s214 = scalar_lea.vmem %s5, %s213
      %p215 = scmp.lt.s32.totalorder %s16, 1
      %s216 = scalar_select %p215, %s16, 1
      %s217 = smul.addr %s216, 36
      %s218 = smul.addr %s217, 4
      %s219 = scalar_lea.vmem %s0, %s218
      %p220 = scmp.lt.s32.totalorder %s16, 1
      %s221 = scalar_select %p220, %s16, 1
      %s222 = smul.addr %s221, 4
      %s223 = smul.addr %s222, 8
      %s224 = scalar_lea.vmem %s5, %s223
      %v226 = vld [vmem:[%s2] sm:$0x1]
      %v227 = vld [vmem:[%s3] sm:$0x1]
      %v228 = vld [vmem:[%s4] sm:$0xff]
      %v229 = vld [vmem:[%s4 + $0x8] sm:$0xff]
      %v230 = vld [vmem:[%s4 + $0x10] sm:$0xff]
      %v231 = vld [vmem:[%s4 + $0x18] sm:$0xff]
      %v232 = vld [vmem:[%s4 + $0x20] sm:$0xff]
      %v233 = vld [vmem:[%s4 + $0x28] sm:$0xff]
      %v234 = vld [vmem:[%s4 + $0x30] sm:$0xff]
      %v235 = vld [vmem:[%s219] sm:$0xf]
      %v236 = vld [vmem:[%s219 + $0x4] sm:$0xf]
      %v237 = vld [vmem:[%s219 + $0x8] sm:$0xf]
      %v238 = vld [vmem:[%s219 + $0xc] sm:$0xf]
      %v239 = vld [vmem:[%s219 + $0x10] sm:$0xf]
      %v240 = vld [vmem:[%s219 + $0x14] sm:$0xf]
      %v241 = vld [vmem:[%s219 + $0x18] sm:$0xf]
      %v242 = vld [vmem:[%s1] sm:$0x3]
      %s243 = scalar_lea.vmem %s219, 36
      %v244 = vld [vmem:[%s243] sm:$0xf]
      %v245 = vld [vmem:[%s243 + $0x4] sm:$0xf]
      %v246 = vld [vmem:[%s243 + $0x8] sm:$0xf]
      %v247 = vld [vmem:[%s243 + $0xc] sm:$0xf]
      %v248 = vld [vmem:[%s243 + $0x10] sm:$0xf]
      %v249 = vld [vmem:[%s243 + $0x14] sm:$0xf]
      %v250 = vld [vmem:[%s243 + $0x18] sm:$0xf]
      %s251 = scalar_lea.vmem %s1, 2
      %v252 = vld [vmem:[%s251] sm:$0x3]
      %v260 = vunpack.c.l.b16 %v244
      %v261 = vunpack.c.l.b16 %v245
      %v262 = vunpack.c.l.b16 %v246
      %v263 = vunpack.c.l.b16 %v247
      %v264 = vunpack.c.l.b16 %v248
      %v265 = vunpack.c.l.b16 %v249
      %v266 = vunpack.c.l.b16 %v250
      %v267 = vpack.c.b16 %v261, %v260
      %v268 = vpack.c.b16 %v263, %v262
      %v269 = vpack.c.b16 %v265, %v264
      %v270 = vpack.c.b16 %v266, %v266
      %vm271 = vcmask 31744
      %v273 = vsel %vm271, %v267, 0
      %v276 = vsel %vm271, %v268, 0
      %v279 = vsel %vm271, %v269, 0
      %v282 = vsel %vm271, %v270, 0
      %vm284 = vcmask 1041408
      %v286 = vsel %vm284, %v252, 0
      %288 = vmatprep.subr.bf16.mxu0 0
      %289 = vmatpush1.bf16.msra.mxu0 %v286
      %290 = vmatprep.subr.bf16.mxu0 0
      %291 = vmatpush1.bf16.msra.mxu0 0
      %292 = vmatprep.subr.bf16.mxu0 0
      %293 = vmatpush1.bf16.msra.mxu0 0
      %294 = vmatprep.subr.bf16.mxu0 0
      %295 = vmatpush1.bf16.msra.mxu0 0
      %296 = vmatprep.subr.bf16.mxu0 0
      %297 = vmatpush1.bf16.msra.mxu0 0
      %298 = vmatprep.subr.bf16.mxu0 0
      %299 = vmatpush1.bf16.msra.mxu0 0
      %300 = vmatprep.subr.bf16.mxu0 0
      %301 = vmatpush1.bf16.msra.mxu0 0
      %302 = vmatprep.subr.bf16.mxu0 0
      %303 = vmatpush1.bf16.msra.mxu0 0
      %304 = vmatprep.subr.bf16.mxu0 0
      %305 = vmatpush1.bf16.msra.mxu0 0
      %306 = vmatprep.subr.bf16.mxu0 0
      %307 = vmatpush1.bf16.msra.mxu0 0
      %308 = vmatprep.subr.bf16.mxu0 0
      %309 = vmatpush1.bf16.msra.mxu0 0
      %310 = vmatprep.subr.bf16.mxu0 0
      %311 = vmatpush1.bf16.msra.mxu0 0
      %312 = vmatprep.subr.bf16.mxu0 0
      %313 = vmatpush1.bf16.msra.mxu0 0
      %314 = vmatprep.subr.bf16.mxu0 0
      %315 = vmatpush1.bf16.msra.mxu0 0
      %316 = vmatprep.subr.bf16.mxu0 0
      %317 = vmatpush1.bf16.msra.mxu0 0
      %318 = vmatprep.subr.bf16.mxu0 0
      %319 = vmatpush1.bf16.msra.mxu0 0
      %320 = vmatprep.mubr.bf16.mxu0 0
      %321 = vmatmul.mubr.bf16.gmra.mrb[0].mxu0 %v273
      %v322 = vpop.f32.mrb[0].mxu0
      %v323 = vadd.f32 0.0, %v322
      %v324 = vpop.f32.mrb[0].mxu0
      %v325 = vpop.f32.mrb[0].mxu0
      %v326 = vadd.f32 0.0, %v325
      %v327 = vpop.f32.mrb[0].mxu0
      %328 = vmatprep.mubr.bf16.mxu0 0
      %329 = vmatmul.mubr.bf16.gmra.mrb[0].mxu0 %v276
      %v330 = vpop.f32.mrb[0].mxu0
      %v331 = vadd.f32 0.0, %v330
      %v332 = vpop.f32.mrb[0].mxu0
      %v333 = vpop.f32.mrb[0].mxu0
      %v334 = vadd.f32 0.0, %v333
      %v335 = vpop.f32.mrb[0].mxu0
      %336 = vmatprep.mubr.bf16.mxu0 0
      %337 = vmatmul.mubr.bf16.gmra.mrb[0].mxu0 %v279
      %v338 = vpop.f32.mrb[0].mxu0
      %v339 = vadd.f32 0.0, %v338
      %v340 = vpop.f32.mrb[0].mxu0
      %v341 = vpop.f32.mrb[0].mxu0
      %v342 = vadd.f32 0.0, %v341
      %v343 = vpop.f32.mrb[0].mxu0
      %344 = vmatprep.mubr.bf16.mxu0 0
      %345 = vmatmul.mubr.bf16.gmra.mrb[0].mxu0 %v282
      %v346 = vpop.f32.mrb[0].mxu0
      %v347 = vadd.f32 0.0, %v346
      %v348 = vpop.f32.mrb[0].mxu0
      %v349 = vpop.f32.mrb[0].mxu0
      %v350 = vpop.f32.mrb[0].mxu0
      %351 = vdwg.mxu0
      %v359 = vunpack.c.l.b16 %v235
      %v360 = vunpack.c.l.b16 %v236
      %v361 = vunpack.c.l.b16 %v237
      %v362 = vunpack.c.l.b16 %v238
      %v363 = vunpack.c.l.b16 %v239
      %v364 = vunpack.c.l.b16 %v240
      %v365 = vunpack.c.l.b16 %v241
      %v366 = vpack.c.b16 %v360, %v359
      %v367 = vpack.c.b16 %v362, %v361
      %v368 = vpack.c.b16 %v364, %v363
      %v369 = vpack.c.b16 %v365, %v365
      %v371 = vsel %vm271, %v366, 0
      %v374 = vsel %vm271, %v367, 0
      %v377 = vsel %vm271, %v368, 0
      %v380 = vsel %vm271, %v369, 0
      %v383 = vsel %vm284, %v242, 0
      %385 = vmatprep.subr.bf16.mxu0 0
      %386 = vmatpush1.bf16.msra.mxu0 %v383
      %387 = vmatprep.subr.bf16.mxu0 0
      %388 = vmatpush1.bf16.msra.mxu0 0
      %389 = vmatprep.subr.bf16.mxu0 0
      %390 = vmatpush1.bf16.msra.mxu0 0
      %391 = vmatprep.subr.bf16.mxu0 0
      %392 = vmatpush1.bf16.msra.mxu0 0
      %393 = vmatprep.subr.bf16.mxu0 0
      %394 = vmatpush1.bf16.msra.mxu0 0
      %395 = vmatprep.subr.bf16.mxu0 0
      %396 = vmatpush1.bf16.msra.mxu0 0
      %397 = vmatprep.subr.bf16.mxu0 0
      %398 = vmatpush1.bf16.msra.mxu0 0
      %399 = vmatprep.subr.bf16.mxu0 0
      %400 = vmatpush1.bf16.msra.mxu0 0
      %401 = vmatprep.subr.bf16.mxu0 0
      %402 = vmatpush1.bf16.msra.mxu0 0
      %403 = vmatprep.subr.bf16.mxu0 0
      %404 = vmatpush1.bf16.msra.mxu0 0
      %405 = vmatprep.subr.bf16.mxu0 0
      %406 = vmatpush1.bf16.msra.mxu0 0
      %407 = vmatprep.subr.bf16.mxu0 0
      %408 = vmatpush1.bf16.msra.mxu0 0
      %409 = vmatprep.subr.bf16.mxu0 0
      %410 = vmatpush1.bf16.msra.mxu0 0
      %411 = vmatprep.subr.bf16.mxu0 0
      %412 = vmatpush1.bf16.msra.mxu0 0
      %413 = vmatprep.subr.bf16.mxu0 0
      %414 = vmatpush1.bf16.msra.mxu0 0
      %415 = vmatprep.subr.bf16.mxu0 0
      %416 = vmatpush1.bf16.msra.mxu0 0
      %417 = vmatprep.mubr.bf16.mxu0 0
      %418 = vmatmul.mubr.bf16.gmra.mrb[0].mxu0 %v371
      %v419 = vpop.f32.mrb[0].mxu0
      %v420 = vadd.f32 %v323, %v419
      %v421 = vpop.f32.mrb[0].mxu0
      %v422 = vpop.f32.mrb[0].mxu0
      %v423 = vadd.f32 %v326, %v422
      %v424 = vpop.f32.mrb[0].mxu0
      %425 = vmatprep.mubr.bf16.mxu0 0
      %426 = vmatmul.mubr.bf16.gmra.mrb[0].mxu0 %v374
      %v427 = vpop.f32.mrb[0].mxu0
      %v428 = vadd.f32 %v331, %v427
      %v429 = vpop.f32.mrb[0].mxu0
      %v430 = vpop.f32.mrb[0].mxu0
      %v431 = vadd.f32 %v334, %v430
      %v432 = vpop.f32.mrb[0].mxu0
      %433 = vmatprep.mubr.bf16.mxu0 0
      %434 = vmatmul.mubr.bf16.gmra.mrb[0].mxu0 %v377
      %v435 = vpop.f32.mrb[0].mxu0
      %v436 = vadd.f32 %v339, %v435
      %v437 = vpop.f32.mrb[0].mxu0
      %v438 = vpop.f32.mrb[0].mxu0
      %v439 = vadd.f32 %v342, %v438
      %v440 = vpop.f32.mrb[0].mxu0
      %441 = vmatprep.mubr.bf16.mxu0 0
      %442 = vmatmul.mubr.bf16.gmra.mrb[0].mxu0 %v380
      %v443 = vpop.f32.mrb[0].mxu0
      %v444 = vadd.f32 %v347, %v443
      %v445 = vpop.f32.mrb[0].mxu0
      %v446 = vpop.f32.mrb[0].mxu0
      %v447 = vpop.f32.mrb[0].mxu0
      %448 = vdwg.mxu0
      %v449 = vld [vmem:[%s219] sm:$0xf]
      %v450 = vld [vmem:[%s219 + $0x4] sm:$0xf]
      %v451 = vld [vmem:[%s219 + $0x8] sm:$0xf]
      %v452 = vld [vmem:[%s219 + $0xc] sm:$0xf]
      %v453 = vld [vmem:[%s219 + $0x10] sm:$0xf]
      %v454 = vld [vmem:[%s219 + $0x14] sm:$0xf]
      %v455 = vld [vmem:[%s219 + $0x18] sm:$0xf]
      %v456 = vld [vmem:[%s219 + $0x1c] sm:$0x1]
      %s457 = scalar_lea.vmem %s1, 4
      %v458 = vld [vmem:[%s457] sm:$0x3]
      %v467 = vunpack.c.l.b16 %v449
      %v468 = vunpack.c.l.b16 %v450
      %v469 = vunpack.c.l.b16 %v451
      %v470 = vunpack.c.l.b16 %v452
      %v471 = vunpack.c.l.b16 %v453
      %v472 = vunpack.c.l.b16 %v454
      %v473 = vunpack.c.l.b16 %v455
      %v474 = vunpack.c.l.b16 %v456
      %v475 = vpack.c.b16 %v468, %v467
      %v476 = vpack.c.b16 %v470, %v469
      %v477 = vpack.c.b16 %v472, %v471
      %v478 = vpack.c.b16 %v474, %v473
      %vm479 = vsmask.f32 7424
      %v481 = vshrl.u32 %v475, 16
      %v483 = vshll.u32 %v475, 16
      %v485 = vrot.slane %v483, 1
      %v486 = vor.u32 %v481, %v485
      %v488 = vshll.u32 %v476, 16
      %v490 = vrot.slane %v488, 1
      %v491 = vsel %vm479, %v486, %v490
      %v492 = vshrl.u32 %v476, 16
      %v494 = vor.u32 %v492, %v490
      %v496 = vshll.u32 %v477, 16
      %v498 = vrot.slane %v496, 1
      %v499 = vsel %vm479, %v494, %v498
      %v500 = vshrl.u32 %v477, 16
      %v502 = vor.u32 %v500, %v498
      %v504 = vshll.u32 %v478, 16
      %v506 = vrot.slane %v504, 1
      %v507 = vsel %vm479, %v502, %v506
      %v508 = vshrl.u32 %v478, 16
      %v510 = vor.u32 %v508, %v506
      %v512 = vsel %vm271, %v491, 0
      %v515 = vsel %vm271, %v499, 0
      %v518 = vsel %vm271, %v507, 0
      %v521 = vsel %vm271, %v510, 0
      %v524 = vsel %vm284, %v458, 0
      %526 = vmatprep.subr.bf16.mxu0 0
      %527 = vmatpush1.bf16.msra.mxu0 %v524
      %528 = vmatprep.subr.bf16.mxu0 0
      %529 = vmatpush1.bf16.msra.mxu0 0
      %530 = vmatprep.subr.bf16.mxu0 0
      %531 = vmatpush1.bf16.msra.mxu0 0
      %532 = vmatprep.subr.bf16.mxu0 0
      %533 = vmatpush1.bf16.msra.mxu0 0
      %534 = vmatprep.subr.bf16.mxu0 0
      %535 = vmatpush1.bf16.msra.mxu0 0
      %536 = vmatprep.subr.bf16.mxu0 0
      %537 = vmatpush1.bf16.msra.mxu0 0
      %538 = vmatprep.subr.bf16.mxu0 0
      %539 = vmatpush1.bf16.msra.mxu0 0
      %540 = vmatprep.subr.bf16.mxu0 0
      %541 = vmatpush1.bf16.msra.mxu0 0
      %542 = vmatprep.subr.bf16.mxu0 0
      %543 = vmatpush1.bf16.msra.mxu0 0
      %544 = vmatprep.subr.bf16.mxu0 0
      %545 = vmatpush1.bf16.msra.mxu0 0
      %546 = vmatprep.subr.bf16.mxu0 0
      %547 = vmatpush1.bf16.msra.mxu0 0
      %548 = vmatprep.subr.bf16.mxu0 0
      %549 = vmatpush1.bf16.msra.mxu0 0
      %550 = vmatprep.subr.bf16.mxu0 0
      %551 = vmatpush1.bf16.msra.mxu0 0
      %552 = vmatprep.subr.bf16.mxu0 0
      %553 = vmatpush1.bf16.msra.mxu0 0
      %554 = vmatprep.subr.bf16.mxu0 0
      %555 = vmatpush1.bf16.msra.mxu0 0
      %556 = vmatprep.subr.bf16.mxu0 0
      %557 = vmatpush1.bf16.msra.mxu0 0
      %558 = vmatprep.mubr.bf16.mxu0 0
      %559 = vmatmul.mubr.bf16.gmra.mrb[0].mxu0 %v512
      %v560 = vpop.f32.mrb[0].mxu0
      %v561 = vadd.f32 0.0, %v560
      %v562 = vpop.f32.mrb[0].mxu0
      %v563 = vpop.f32.mrb[0].mxu0
      %v564 = vadd.f32 0.0, %v563
      %v565 = vpop.f32.mrb[0].mxu0
      %566 = vmatprep.mubr.bf16.mxu0 0
      %567 = vmatmul.mubr.bf16.gmra.mrb[0].mxu0 %v515
      %v568 = vpop.f32.mrb[0].mxu0
      %v569 = vadd.f32 0.0, %v568
      %v570 = vpop.f32.mrb[0].mxu0
      %v571 = vpop.f32.mrb[0].mxu0
      %v572 = vadd.f32 0.0, %v571
      %v573 = vpop.f32.mrb[0].mxu0
      %574 = vmatprep.mubr.bf16.mxu0 0
      %575 = vmatmul.mubr.bf16.gmra.mrb[0].mxu0 %v518
      %v576 = vpop.f32.mrb[0].mxu0
      %v577 = vadd.f32 0.0, %v576
      %v578 = vpop.f32.mrb[0].mxu0
      %v579 = vpop.f32.mrb[0].mxu0
      %v580 = vadd.f32 0.0, %v579
      %v581 = vpop.f32.mrb[0].mxu0
      %582 = vmatprep.mubr.bf16.mxu0 0
      %583 = vmatmul.mubr.bf16.gmra.mrb[0].mxu0 %v521
      %v584 = vpop.f32.mrb[0].mxu0
      %v585 = vadd.f32 0.0, %v584
      %v586 = vpop.f32.mrb[0].mxu0
      %v587 = vpop.f32.mrb[0].mxu0
      %v588 = vpop.f32.mrb[0].mxu0
      %589 = vdwg.mxu0
      %v590 = vadd.f32 %v420, %v561
      %v591 = vadd.f32 %v423, %v564
      %v592 = vadd.f32 %v428, %v569
      %v593 = vadd.f32 %v431, %v572
      %v594 = vadd.f32 %v436, %v577
      %v595 = vadd.f32 %v439, %v580
      %v596 = vadd.f32 %v444, %v585
      %s597 = scalar_lea.vmem %s219, 72
      %v598 = vld [vmem:[%s597] sm:$0xf]
      %v599 = vld [vmem:[%s597 + $0x4] sm:$0xf]
      %v600 = vld [vmem:[%s597 + $0x8] sm:$0xf]
      %v601 = vld [vmem:[%s597 + $0xc] sm:$0xf]
      %v602 = vld [vmem:[%s597 + $0x10] sm:$0xf]
      %v603 = vld [vmem:[%s597 + $0x14] sm:$0xf]
      %v604 = vld [vmem:[%s597 + $0x18] sm:$0xf]
      %s605 = scalar_lea.vmem %s1, 6
      %v606 = vld [vmem:[%s605] sm:$0x3]
      %v614 = vunpack.c.l.b16 %v598
      %v615 = vunpack.c.l.b16 %v599
      %v616 = vunpack.c.l.b16 %v600
      %v617 = vunpack.c.l.b16 %v601
      %v618 = vunpack.c.l.b16 %v602
      %v619 = vunpack.c.l.b16 %v603
      %v620 = vunpack.c.l.b16 %v604
      %v621 = vpack.c.b16 %v615, %v614
      %v622 = vpack.c.b16 %v617, %v616
      %v623 = vpack.c.b16 %v619, %v618
      %v624 = vpack.c.b16 %v620, %v620
      %v626 = vsel %vm271, %v621, 0
      %v629 = vsel %vm271, %v622, 0
      %v632 = vsel %vm271, %v623, 0
      %v635 = vsel %vm271, %v624, 0
      %v638 = vsel %vm284, %v606, 0
      %640 = vmatprep.subr.bf16.mxu0 0
      %641 = vmatpush1.bf16.msra.mxu0 %v638
      %642 = vmatprep.subr.bf16.mxu0 0
      %643 = vmatpush1.bf16.msra.mxu0 0
      %644 = vmatprep.subr.bf16.mxu0 0
      %645 = vmatpush1.bf16.msra.mxu0 0
      %646 = vmatprep.subr.bf16.mxu0 0
      %647 = vmatpush1.bf16.msra.mxu0 0
      %648 = vmatprep.subr.bf16.mxu0 0
      %649 = vmatpush1.bf16.msra.mxu0 0
      %650 = vmatprep.subr.bf16.mxu0 0
      %651 = vmatpush1.bf16.msra.mxu0 0
      %652 = vmatprep.subr.bf16.mxu0 0
      %653 = vmatpush1.bf16.msra.mxu0 0
      %654 = vmatprep.subr.bf16.mxu0 0
      %655 = vmatpush1.bf16.msra.mxu0 0
      %656 = vmatprep.subr.bf16.mxu0 0
      %657 = vmatpush1.bf16.msra.mxu0 0
      %658 = vmatprep.subr.bf16.mxu0 0
      %659 = vmatpush1.bf16.msra.mxu0 0
      %660 = vmatprep.subr.bf16.mxu0 0
      %661 = vmatpush1.bf16.msra.mxu0 0
      %662 = vmatprep.subr.bf16.mxu0 0
      %663 = vmatpush1.bf16.msra.mxu0 0
      %664 = vmatprep.subr.bf16.mxu0 0
      %665 = vmatpush1.bf16.msra.mxu0 0
      %666 = vmatprep.subr.bf16.mxu0 0
      %667 = vmatpush1.bf16.msra.mxu0 0
      %668 = vmatprep.subr.bf16.mxu0 0
      %669 = vmatpush1.bf16.msra.mxu0 0
      %670 = vmatprep.subr.bf16.mxu0 0
      %671 = vmatpush1.bf16.msra.mxu0 0
      %672 = vmatprep.mubr.bf16.mxu0 0
      %673 = vmatmul.mubr.bf16.gmra.mrb[0].mxu0 %v626
      %v674 = vpop.f32.mrb[0].mxu0
      %v675 = vadd.f32 0.0, %v674
      %v676 = vpop.f32.mrb[0].mxu0
      %v677 = vpop.f32.mrb[0].mxu0
      %v678 = vadd.f32 0.0, %v677
      %v679 = vpop.f32.mrb[0].mxu0
      %680 = vmatprep.mubr.bf16.mxu0 0
      %681 = vmatmul.mubr.bf16.gmra.mrb[0].mxu0 %v629
      %v682 = vpop.f32.mrb[0].mxu0
      %v683 = vadd.f32 0.0, %v682
      %v684 = vpop.f32.mrb[0].mxu0
      %v685 = vpop.f32.mrb[0].mxu0
      %v686 = vadd.f32 0.0, %v685
      %v687 = vpop.f32.mrb[0].mxu0
      %688 = vmatprep.mubr.bf16.mxu0 0
      %689 = vmatmul.mubr.bf16.gmra.mrb[0].mxu0 %v632
      %v690 = vpop.f32.mrb[0].mxu0
      %v691 = vadd.f32 0.0, %v690
      %v692 = vpop.f32.mrb[0].mxu0
      %v693 = vpop.f32.mrb[0].mxu0
      %v694 = vadd.f32 0.0, %v693
      %v695 = vpop.f32.mrb[0].mxu0
      %696 = vmatprep.mubr.bf16.mxu0 0
      %697 = vmatmul.mubr.bf16.gmra.mrb[0].mxu0 %v635
      %v698 = vpop.f32.mrb[0].mxu0
      %v699 = vadd.f32 0.0, %v698
      %v700 = vpop.f32.mrb[0].mxu0
      %v701 = vpop.f32.mrb[0].mxu0
      %v702 = vpop.f32.mrb[0].mxu0
      %703 = vdwg.mxu0
      %v704 = vadd.f32 %v590, %v675
      %v705 = vadd.f32 %v591, %v678
      %v706 = vadd.f32 %v592, %v683
      %v707 = vadd.f32 %v593, %v686
      %v708 = vadd.f32 %v594, %v691
      %v709 = vadd.f32 %v595, %v694
      %v710 = vadd.f32 %v596, %v699
      %s711 = scalar_lea.vmem %s219, 108
      %v712 = vld [vmem:[%s711] sm:$0xf]
      %v713 = vld [vmem:[%s711 + $0x4] sm:$0xf]
      %v714 = vld [vmem:[%s711 + $0x8] sm:$0xf]
      %v715 = vld [vmem:[%s711 + $0xc] sm:$0xf]
      %v716 = vld [vmem:[%s711 + $0x10] sm:$0xf]
      %v717 = vld [vmem:[%s711 + $0x14] sm:$0xf]
      %v718 = vld [vmem:[%s711 + $0x18] sm:$0xf]
      %s719 = scalar_lea.vmem %s1, 8
      %v720 = vld [vmem:[%s719] sm:$0x3]
      %v728 = vunpack.c.l.b16 %v712
      %v729 = vunpack.c.l.b16 %v713
      %v730 = vunpack.c.l.b16 %v714
      %v731 = vunpack.c.l.b16 %v715
      %v732 = vunpack.c.l.b16 %v716
      %v733 = vunpack.c.l.b16 %v717
      %v734 = vunpack.c.l.b16 %v718
      %v735 = vpack.c.b16 %v729, %v728
      %v736 = vpack.c.b16 %v731, %v730
      %v737 = vpack.c.b16 %v733, %v732
      %v738 = vpack.c.b16 %v734, %v734
      %v740 = vsel %vm271, %v735, 0
      %v743 = vsel %vm271, %v736, 0
      %v746 = vsel %vm271, %v737, 0
      %v749 = vsel %vm271, %v738, 0
      %v752 = vsel %vm284, %v720, 0
      %754 = vmatprep.subr.bf16.mxu0 0
      %755 = vmatpush1.bf16.msra.mxu0 %v752
      %756 = vmatprep.subr.bf16.mxu0 0
      %757 = vmatpush1.bf16.msra.mxu0 0
      %758 = vmatprep.subr.bf16.mxu0 0
      %759 = vmatpush1.bf16.msra.mxu0 0
      %760 = vmatprep.subr.bf16.mxu0 0
      %761 = vmatpush1.bf16.msra.mxu0 0
      %762 = vmatprep.subr.bf16.mxu0 0
      %763 = vmatpush1.bf16.msra.mxu0 0
      %764 = vmatprep.subr.bf16.mxu0 0
      %765 = vmatpush1.bf16.msra.mxu0 0
      %766 = vmatprep.subr.bf16.mxu0 0
      %767 = vmatpush1.bf16.msra.mxu0 0
      %768 = vmatprep.subr.bf16.mxu0 0
      %769 = vmatpush1.bf16.msra.mxu0 0
      %770 = vmatprep.subr.bf16.mxu0 0
      %771 = vmatpush1.bf16.msra.mxu0 0
      %772 = vmatprep.subr.bf16.mxu0 0
      %773 = vmatpush1.bf16.msra.mxu0 0
      %774 = vmatprep.subr.bf16.mxu0 0
      %775 = vmatpush1.bf16.msra.mxu0 0
      %776 = vmatprep.subr.bf16.mxu0 0
      %777 = vmatpush1.bf16.msra.mxu0 0
      %778 = vmatprep.subr.bf16.mxu0 0
      %779 = vmatpush1.bf16.msra.mxu0 0
      %780 = vmatprep.subr.bf16.mxu0 0
      %781 = vmatpush1.bf16.msra.mxu0 0
      %782 = vmatprep.subr.bf16.mxu0 0
      %783 = vmatpush1.bf16.msra.mxu0 0
      %784 = vmatprep.subr.bf16.mxu0 0
      %785 = vmatpush1.bf16.msra.mxu0 0
      %786 = vmatprep.mubr.bf16.mxu0 0
      %787 = vmatmul.mubr.bf16.gmra.mrb[0].mxu0 %v740
      %v788 = vpop.f32.mrb[0].mxu0
      %v789 = vadd.f32 0.0, %v788
      %v790 = vpop.f32.mrb[0].mxu0
      %v791 = vpop.f32.mrb[0].mxu0
      %v792 = vadd.f32 0.0, %v791
      %v793 = vpop.f32.mrb[0].mxu0
      %794 = vmatprep.mubr.bf16.mxu0 0
      %795 = vmatmul.mubr.bf16.gmra.mrb[0].mxu0 %v743
      %v796 = vpop.f32.mrb[0].mxu0
      %v797 = vadd.f32 0.0, %v796
      %v798 = vpop.f32.mrb[0].mxu0
      %v799 = vpop.f32.mrb[0].mxu0
      %v800 = vadd.f32 0.0, %v799
      %v801 = vpop.f32.mrb[0].mxu0
      %802 = vmatprep.mubr.bf16.mxu0 0
      %803 = vmatmul.mubr.bf16.gmra.mrb[0].mxu0 %v746
      %v804 = vpop.f32.mrb[0].mxu0
      %v805 = vadd.f32 0.0, %v804
      %v806 = vpop.f32.mrb[0].mxu0
      %v807 = vpop.f32.mrb[0].mxu0
      %v808 = vadd.f32 0.0, %v807
      %v809 = vpop.f32.mrb[0].mxu0
      %810 = vmatprep.mubr.bf16.mxu0 0
      %811 = vmatmul.mubr.bf16.gmra.mrb[0].mxu0 %v749
      %v812 = vpop.f32.mrb[0].mxu0
      %v813 = vadd.f32 0.0, %v812
      %v814 = vpop.f32.mrb[0].mxu0
      %v815 = vpop.f32.mrb[0].mxu0
      %v816 = vpop.f32.mrb[0].mxu0
      %817 = vdwg.mxu0
      %v818 = vadd.f32 %v704, %v789
      %v819 = vadd.f32 %v705, %v792
      %v820 = vadd.f32 %v706, %v797
      %v821 = vadd.f32 %v707, %v800
      %v822 = vadd.f32 %v708, %v805
      %v823 = vadd.f32 %v709, %v808
      %v824 = vadd.f32 %v710, %v813
      %v825 = vld [vmem:[%s597] sm:$0xf]
      %v826 = vld [vmem:[%s597 + $0x4] sm:$0xf]
      %v827 = vld [vmem:[%s597 + $0x8] sm:$0xf]
      %v828 = vld [vmem:[%s597 + $0xc] sm:$0xf]
      %v829 = vld [vmem:[%s597 + $0x10] sm:$0xf]
      %v830 = vld [vmem:[%s597 + $0x14] sm:$0xf]
      %v831 = vld [vmem:[%s597 + $0x18] sm:$0xf]
      %v832 = vld [vmem:[%s597 + $0x1c] sm:$0x1]
      %s833 = scalar_lea.vmem %s1, 10
      %v834 = vld [vmem:[%s833] sm:$0x3]
      %v843 = vunpack.c.l.b16 %v825
      %v844 = vunpack.c.l.b16 %v826
      %v845 = vunpack.c.l.b16 %v827
      %v846 = vunpack.c.l.b16 %v828
      %v847 = vunpack.c.l.b16 %v829
      %v848 = vunpack.c.l.b16 %v830
      %v849 = vunpack.c.l.b16 %v831
      %v850 = vunpack.c.l.b16 %v832
      %v851 = vpack.c.b16 %v844, %v843
      %v852 = vpack.c.b16 %v846, %v845
      %v853 = vpack.c.b16 %v848, %v847
      %v854 = vpack.c.b16 %v850, %v849
      %v856 = vshrl.u32 %v851, 16
      %v858 = vshll.u32 %v851, 16
      %v860 = vrot.slane %v858, 1
      %v861 = vor.u32 %v856, %v860
      %v863 = vshll.u32 %v852, 16
      %v865 = vrot.slane %v863, 1
      %v866 = vsel %vm479, %v861, %v865
      %v867 = vshrl.u32 %v852, 16
      %v869 = vor.u32 %v867, %v865
      %v871 = vshll.u32 %v853, 16
      %v873 = vrot.slane %v871, 1
      %v874 = vsel %vm479, %v869, %v873
      %v875 = vshrl.u32 %v853, 16
      %v877 = vor.u32 %v875, %v873
      %v879 = vshll.u32 %v854, 16
      %v881 = vrot.slane %v879, 1
      %v882 = vsel %vm479, %v877, %v881
      %v883 = vshrl.u32 %v854, 16
      %v885 = vor.u32 %v883, %v881
      %v887 = vsel %vm271, %v866, 0
      %v890 = vsel %vm271, %v874, 0
      %v893 = vsel %vm271, %v882, 0
      %v896 = vsel %vm271, %v885, 0
      %v899 = vsel %vm284, %v834, 0
      %901 = vmatprep.subr.bf16.mxu0 0
      %902 = vmatpush1.bf16.msra.mxu0 %v899
      %903 = vmatprep.subr.bf16.mxu0 0
      %904 = vmatpush1.bf16.msra.mxu0 0
      %905 = vmatprep.subr.bf16.mxu0 0
      %906 = vmatpush1.bf16.msra.mxu0 0
      %907 = vmatprep.subr.bf16.mxu0 0
      %908 = vmatpush1.bf16.msra.mxu0 0
      %909 = vmatprep.subr.bf16.mxu0 0
      %910 = vmatpush1.bf16.msra.mxu0 0
      %911 = vmatprep.subr.bf16.mxu0 0
      %912 = vmatpush1.bf16.msra.mxu0 0
      %913 = vmatprep.subr.bf16.mxu0 0
      %914 = vmatpush1.bf16.msra.mxu0 0
      %915 = vmatprep.subr.bf16.mxu0 0
      %916 = vmatpush1.bf16.msra.mxu0 0
      %917 = vmatprep.subr.bf16.mxu0 0
      %918 = vmatpush1.bf16.msra.mxu0 0
      %919 = vmatprep.subr.bf16.mxu0 0
      %920 = vmatpush1.bf16.msra.mxu0 0
      %921 = vmatprep.subr.bf16.mxu0 0
      %922 = vmatpush1.bf16.msra.mxu0 0
      %923 = vmatprep.subr.bf16.mxu0 0
      %924 = vmatpush1.bf16.msra.mxu0 0
      %925 = vmatprep.subr.bf16.mxu0 0
      %926 = vmatpush1.bf16.msra.mxu0 0
      %927 = vmatprep.subr.bf16.mxu0 0
      %928 = vmatpush1.bf16.msra.mxu0 0
      %929 = vmatprep.subr.bf16.mxu0 0
      %930 = vmatpush1.bf16.msra.mxu0 0
      %931 = vmatprep.subr.bf16.mxu0 0
      %932 = vmatpush1.bf16.msra.mxu0 0
      %933 = vmatprep.mubr.bf16.mxu0 0
      %934 = vmatmul.mubr.bf16.gmra.mrb[0].mxu0 %v887
      %v935 = vpop.f32.mrb[0].mxu0
      %v936 = vadd.f32 0.0, %v935
      %v937 = vpop.f32.mrb[0].mxu0
      %v938 = vpop.f32.mrb[0].mxu0
      %v939 = vadd.f32 0.0, %v938
      %v940 = vpop.f32.mrb[0].mxu0
      %941 = vmatprep.mubr.bf16.mxu0 0
      %942 = vmatmul.mubr.bf16.gmra.mrb[0].mxu0 %v890
      %v943 = vpop.f32.mrb[0].mxu0
      %v944 = vadd.f32 0.0, %v943
      %v945 = vpop.f32.mrb[0].mxu0
      %v946 = vpop.f32.mrb[0].mxu0
      %v947 = vadd.f32 0.0, %v946
      %v948 = vpop.f32.mrb[0].mxu0
      %949 = vmatprep.mubr.bf16.mxu0 0
      %950 = vmatmul.mubr.bf16.gmra.mrb[0].mxu0 %v893
      %v951 = vpop.f32.mrb[0].mxu0
      %v952 = vadd.f32 0.0, %v951
      %v953 = vpop.f32.mrb[0].mxu0
      %v954 = vpop.f32.mrb[0].mxu0
      %v955 = vadd.f32 0.0, %v954
      %v956 = vpop.f32.mrb[0].mxu0
      %957 = vmatprep.mubr.bf16.mxu0 0
      %958 = vmatmul.mubr.bf16.gmra.mrb[0].mxu0 %v896
      %v959 = vpop.f32.mrb[0].mxu0
      %v960 = vadd.f32 0.0, %v959
      %v961 = vpop.f32.mrb[0].mxu0
      %v962 = vpop.f32.mrb[0].mxu0
      %v963 = vpop.f32.mrb[0].mxu0
      %964 = vdwg.mxu0
      %v965 = vadd.f32 %v818, %v936
      %v966 = vadd.f32 %v819, %v939
      %v967 = vadd.f32 %v820, %v944
      %v968 = vadd.f32 %v821, %v947
      %v969 = vadd.f32 %v822, %v952
      %v970 = vadd.f32 %v823, %v955
      %v971 = vadd.f32 %v824, %v960
      %v972 = vld [vmem:[%s219 + $0x1c] sm:$0xf]
      %s973 = scalar_lea.vmem %s1, 12
      %v974 = vld [vmem:[%s973] sm:$0x3]
      %v976 = vunpack.c.l.b16 %v972
      %v977 = vpack.c.b16 %v469, %v468
      %v978 = vpack.c.b16 %v471, %v470
      %v979 = vpack.c.b16 %v473, %v472
      %v980 = vpack.c.b16 %v976, %v976
      %v982 = vsel %vm271, %v977, 0
      %v985 = vsel %vm271, %v978, 0
      %v988 = vsel %vm271, %v979, 0
      %v991 = vsel %vm271, %v980, 0
      %v994 = vsel %vm284, %v974, 0
      %996 = vmatprep.subr.bf16.mxu0 0
      %997 = vmatpush1.bf16.msra.mxu0 %v994
      %998 = vmatprep.subr.bf16.mxu0 0
      %999 = vmatpush1.bf16.msra.mxu0 0
      %1000 = vmatprep.subr.bf16.mxu0 0
      %1001 = vmatpush1.bf16.msra.mxu0 0
      %1002 = vmatprep.subr.bf16.mxu0 0
      %1003 = vmatpush1.bf16.msra.mxu0 0
      %1004 = vmatprep.subr.bf16.mxu0 0
      %1005 = vmatpush1.bf16.msra.mxu0 0
      %1006 = vmatprep.subr.bf16.mxu0 0
      %1007 = vmatpush1.bf16.msra.mxu0 0
      %1008 = vmatprep.subr.bf16.mxu0 0
      %1009 = vmatpush1.bf16.msra.mxu0 0
      %1010 = vmatprep.subr.bf16.mxu0 0
      %1011 = vmatpush1.bf16.msra.mxu0 0
      %1012 = vmatprep.subr.bf16.mxu0 0
      %1013 = vmatpush1.bf16.msra.mxu0 0
      %1014 = vmatprep.subr.bf16.mxu0 0
      %1015 = vmatpush1.bf16.msra.mxu0 0
      %1016 = vmatprep.subr.bf16.mxu0 0
      %1017 = vmatpush1.bf16.msra.mxu0 0
      %1018 = vmatprep.subr.bf16.mxu0 0
      %1019 = vmatpush1.bf16.msra.mxu0 0
      %1020 = vmatprep.subr.bf16.mxu0 0
      %1021 = vmatpush1.bf16.msra.mxu0 0
      %1022 = vmatprep.subr.bf16.mxu0 0
      %1023 = vmatpush1.bf16.msra.mxu0 0
      %1024 = vmatprep.subr.bf16.mxu0 0
      %1025 = vmatpush1.bf16.msra.mxu0 0
      %1026 = vmatprep.subr.bf16.mxu0 0
      %1027 = vmatpush1.bf16.msra.mxu0 0
      %1028 = vmatprep.mubr.bf16.mxu0 0
      %1029 = vmatmul.mubr.bf16.gmra.mrb[0].mxu0 %v982
      %v1030 = vpop.f32.mrb[0].mxu0
      %v1031 = vadd.f32 0.0, %v1030
      %v1032 = vpop.f32.mrb[0].mxu0
      %v1033 = vpop.f32.mrb[0].mxu0
      %v1034 = vadd.f32 0.0, %v1033
      %v1035 = vpop.f32.mrb[0].mxu0
      %1036 = vmatprep.mubr.bf16.mxu0 0
      %1037 = vmatmul.mubr.bf16.gmra.mrb[0].mxu0 %v985
      %v1038 = vpop.f32.mrb[0].mxu0
      %v1039 = vadd.f32 0.0, %v1038
      %v1040 = vpop.f32.mrb[0].mxu0
      %v1041 = vpop.f32.mrb[0].mxu0
      %v1042 = vadd.f32 0.0, %v1041
      %v1043 = vpop.f32.mrb[0].mxu0
      %1044 = vmatprep.mubr.bf16.mxu0 0
      %1045 = vmatmul.mubr.bf16.gmra.mrb[0].mxu0 %v988
      %v1046 = vpop.f32.mrb[0].mxu0
      %v1047 = vadd.f32 0.0, %v1046
      %v1048 = vpop.f32.mrb[0].mxu0
      %v1049 = vpop.f32.mrb[0].mxu0
      %v1050 = vadd.f32 0.0, %v1049
      %v1051 = vpop.f32.mrb[0].mxu0
      %1052 = vmatprep.mubr.bf16.mxu0 0
      %1053 = vmatmul.mubr.bf16.gmra.mrb[0].mxu0 %v991
      %v1054 = vpop.f32.mrb[0].mxu0
      %v1055 = vadd.f32 0.0, %v1054
      %v1056 = vpop.f32.mrb[0].mxu0
      %v1057 = vpop.f32.mrb[0].mxu0
      %v1058 = vpop.f32.mrb[0].mxu0
      %1059 = vdwg.mxu0
      %v1060 = vadd.f32 %v965, %v1031
      %v1061 = vadd.f32 %v966, %v1034
      %v1062 = vadd.f32 %v967, %v1039
      %v1063 = vadd.f32 %v968, %v1042
      %v1064 = vadd.f32 %v969, %v1047
      %v1065 = vadd.f32 %v970, %v1050
      %v1066 = vadd.f32 %v971, %v1055
      %v1067 = vld [vmem:[%s243 + $0x4] sm:$0xf]
      %v1068 = vld [vmem:[%s243 + $0x8] sm:$0xf]
      %v1069 = vld [vmem:[%s243 + $0xc] sm:$0xf]
      %v1070 = vld [vmem:[%s243 + $0x10] sm:$0xf]
      %v1071 = vld [vmem:[%s243 + $0x14] sm:$0xf]
      %v1072 = vld [vmem:[%s243 + $0x18] sm:$0xf]
      %v1073 = vld [vmem:[%s243 + $0x1c] sm:$0xf]
      %s1074 = scalar_lea.vmem %s1, 14
      %v1075 = vld [vmem:[%s1074] sm:$0x3]
      %v1083 = vunpack.c.l.b16 %v1067
      %v1084 = vunpack.c.l.b16 %v1068
      %v1085 = vunpack.c.l.b16 %v1069
      %v1086 = vunpack.c.l.b16 %v1070
      %v1087 = vunpack.c.l.b16 %v1071
      %v1088 = vunpack.c.l.b16 %v1072
      %v1089 = vunpack.c.l.b16 %v1073
      %v1090 = vpack.c.b16 %v1084, %v1083
      %v1091 = vpack.c.b16 %v1086, %v1085
      %v1092 = vpack.c.b16 %v1088, %v1087
      %v1093 = vpack.c.b16 %v1089, %v1089
      %v1095 = vsel %vm271, %v1090, 0
      %v1098 = vsel %vm271, %v1091, 0
      %v1101 = vsel %vm271, %v1092, 0
      %v1104 = vsel %vm271, %v1093, 0
      %v1107 = vsel %vm284, %v1075, 0
      %1109 = vmatprep.subr.bf16.mxu0 0
      %1110 = vmatpush1.bf16.msra.mxu0 %v1107
      %1111 = vmatprep.subr.bf16.mxu0 0
      %1112 = vmatpush1.bf16.msra.mxu0 0
      %1113 = vmatprep.subr.bf16.mxu0 0
      %1114 = vmatpush1.bf16.msra.mxu0 0
      %1115 = vmatprep.subr.bf16.mxu0 0
      %1116 = vmatpush1.bf16.msra.mxu0 0
      %1117 = vmatprep.subr.bf16.mxu0 0
      %1118 = vmatpush1.bf16.msra.mxu0 0
      %1119 = vmatprep.subr.bf16.mxu0 0
      %1120 = vmatpush1.bf16.msra.mxu0 0
      %1121 = vmatprep.subr.bf16.mxu0 0
      %1122 = vmatpush1.bf16.msra.mxu0 0
      %1123 = vmatprep.subr.bf16.mxu0 0
      %1124 = vmatpush1.bf16.msra.mxu0 0
      %1125 = vmatprep.subr.bf16.mxu0 0
      %1126 = vmatpush1.bf16.msra.mxu0 0
      %1127 = vmatprep.subr.bf16.mxu0 0
      %1128 = vmatpush1.bf16.msra.mxu0 0
      %1129 = vmatprep.subr.bf16.mxu0 0
      %1130 = vmatpush1.bf16.msra.mxu0 0
      %1131 = vmatprep.subr.bf16.mxu0 0
      %1132 = vmatpush1.bf16.msra.mxu0 0
      %1133 = vmatprep.subr.bf16.mxu0 0
      %1134 = vmatpush1.bf16.msra.mxu0 0
      %1135 = vmatprep.subr.bf16.mxu0 0
      %1136 = vmatpush1.bf16.msra.mxu0 0
      %1137 = vmatprep.subr.bf16.mxu0 0
      %1138 = vmatpush1.bf16.msra.mxu0 0
      %1139 = vmatprep.subr.bf16.mxu0 0
      %1140 = vmatpush1.bf16.msra.mxu0 0
      %1141 = vmatprep.mubr.bf16.mxu0 0
      %1142 = vmatmul.mubr.bf16.gmra.mrb[0].mxu0 %v1095
      %v1143 = vpop.f32.mrb[0].mxu0
      %v1144 = vadd.f32 0.0, %v1143
      %v1145 = vpop.f32.mrb[0].mxu0
      %v1146 = vpop.f32.mrb[0].mxu0
      %v1147 = vadd.f32 0.0, %v1146
      %v1148 = vpop.f32.mrb[0].mxu0
      %1149 = vmatprep.mubr.bf16.mxu0 0
      %1150 = vmatmul.mubr.bf16.gmra.mrb[0].mxu0 %v1098
      %v1151 = vpop.f32.mrb[0].mxu0
      %v1152 = vadd.f32 0.0, %v1151
      %v1153 = vpop.f32.mrb[0].mxu0
      %v1154 = vpop.f32.mrb[0].mxu0
      %v1155 = vadd.f32 0.0, %v1154
      %v1156 = vpop.f32.mrb[0].mxu0
      %1157 = vmatprep.mubr.bf16.mxu0 0
      %1158 = vmatmul.mubr.bf16.gmra.mrb[0].mxu0 %v1101
      %v1159 = vpop.f32.mrb[0].mxu0
      %v1160 = vadd.f32 0.0, %v1159
      %v1161 = vpop.f32.mrb[0].mxu0
      %v1162 = vpop.f32.mrb[0].mxu0
      %v1163 = vadd.f32 0.0, %v1162
      %v1164 = vpop.f32.mrb[0].mxu0
      %1165 = vmatprep.mubr.bf16.mxu0 0
      %1166 = vmatmul.mubr.bf16.gmra.mrb[0].mxu0 %v1104
      %v1167 = vpop.f32.mrb[0].mxu0
      %v1168 = vadd.f32 0.0, %v1167
      %v1169 = vpop.f32.mrb[0].mxu0
      %v1170 = vpop.f32.mrb[0].mxu0
      %v1171 = vpop.f32.mrb[0].mxu0
      %1172 = vdwg.mxu0
      %v1173 = vadd.f32 %v1060, %v1144
      %v1174 = vadd.f32 %v1061, %v1147
      %v1175 = vadd.f32 %v1062, %v1152
      %v1176 = vadd.f32 %v1063, %v1155
      %v1177 = vadd.f32 %v1064, %v1160
      %v1178 = vadd.f32 %v1065, %v1163
      %v1179 = vadd.f32 %v1066, %v1168
      %v1180 = vld [vmem:[%s219 + $0x4] sm:$0xf]
      %v1181 = vld [vmem:[%s219 + $0x8] sm:$0xf]
      %v1182 = vld [vmem:[%s219 + $0xc] sm:$0xf]
      %v1183 = vld [vmem:[%s219 + $0x10] sm:$0xf]
      %v1184 = vld [vmem:[%s219 + $0x14] sm:$0xf]
      %v1185 = vld [vmem:[%s219 + $0x18] sm:$0xf]
      %v1186 = vld [vmem:[%s219 + $0x1c] sm:$0xf]
      %v1187 = vld [vmem:[%s219 + $0x20] sm:$0x1]
      %s1188 = scalar_lea.vmem %s1, 16
      %v1189 = vld [vmem:[%s1188] sm:$0x3]
      %v1198 = vunpack.c.l.b16 %v1180
      %v1199 = vunpack.c.l.b16 %v1181
      %v1200 = vunpack.c.l.b16 %v1182
      %v1201 = vunpack.c.l.b16 %v1183
      %v1202 = vunpack.c.l.b16 %v1184
      %v1203 = vunpack.c.l.b16 %v1185
      %v1204 = vunpack.c.l.b16 %v1186
      %v1205 = vunpack.c.l.b16 %v1187
      %v1206 = vpack.c.b16 %v1199, %v1198
      %v1207 = vpack.c.b16 %v1201, %v1200
      %v1208 = vpack.c.b16 %v1203, %v1202
      %v1209 = vpack.c.b16 %v1205, %v1204
      %v1211 = vshrl.u32 %v1206, 16
      %v1213 = vshll.u32 %v1206, 16
      %v1215 = vrot.slane %v1213, 1
      %v1216 = vor.u32 %v1211, %v1215
      %v1218 = vshll.u32 %v1207, 16
      %v1220 = vrot.slane %v1218, 1
      %v1221 = vsel %vm479, %v1216, %v1220
      %v1222 = vshrl.u32 %v1207, 16
      %v1224 = vor.u32 %v1222, %v1220
      %v1226 = vshll.u32 %v1208, 16
      %v1228 = vrot.slane %v1226, 1
      %v1229 = vsel %vm479, %v1224, %v1228
      %v1230 = vshrl.u32 %v1208, 16
      %v1232 = vor.u32 %v1230, %v1228
      %v1234 = vshll.u32 %v1209, 16
      %v1236 = vrot.slane %v1234, 1
      %v1237 = vsel %vm479, %v1232, %v1236
      %v1238 = vshrl.u32 %v1209, 16
      %v1240 = vor.u32 %v1238, %v1236
      %v1242 = vsel %vm271, %v1221, 0
      %v1245 = vsel %vm271, %v1229, 0
      %v1248 = vsel %vm271, %v1237, 0
      %v1251 = vsel %vm271, %v1240, 0
      %v1254 = vsel %vm284, %v1189, 0
      %1256 = vmatprep.subr.bf16.mxu0 0
      %1257 = vmatpush1.bf16.msra.mxu0 %v1254
      %1258 = vmatprep.subr.bf16.mxu0 0
      %1259 = vmatpush1.bf16.msra.mxu0 0
      %1260 = vmatprep.subr.bf16.mxu0 0
      %1261 = vmatpush1.bf16.msra.mxu0 0
      %1262 = vmatprep.subr.bf16.mxu0 0
      %1263 = vmatpush1.bf16.msra.mxu0 0
      %1264 = vmatprep.subr.bf16.mxu0 0
      %1265 = vmatpush1.bf16.msra.mxu0 0
      %1266 = vmatprep.subr.bf16.mxu0 0
      %1267 = vmatpush1.bf16.msra.mxu0 0
      %1268 = vmatprep.subr.bf16.mxu0 0
      %1269 = vmatpush1.bf16.msra.mxu0 0
      %1270 = vmatprep.subr.bf16.mxu0 0
      %1271 = vmatpush1.bf16.msra.mxu0 0
      %1272 = vmatprep.subr.bf16.mxu0 0
      %1273 = vmatpush1.bf16.msra.mxu0 0
      %1274 = vmatprep.subr.bf16.mxu0 0
      %1275 = vmatpush1.bf16.msra.mxu0 0
      %1276 = vmatprep.subr.bf16.mxu0 0
      %1277 = vmatpush1.bf16.msra.mxu0 0
      %1278 = vmatprep.subr.bf16.mxu0 0
      %1279 = vmatpush1.bf16.msra.mxu0 0
      %1280 = vmatprep.subr.bf16.mxu0 0
      %1281 = vmatpush1.bf16.msra.mxu0 0
      %1282 = vmatprep.subr.bf16.mxu0 0
      %1283 = vmatpush1.bf16.msra.mxu0 0
      %1284 = vmatprep.subr.bf16.mxu0 0
      %1285 = vmatpush1.bf16.msra.mxu0 0
      %1286 = vmatprep.subr.bf16.mxu0 0
      %1287 = vmatpush1.bf16.msra.mxu0 0
      %1288 = vmatprep.mubr.bf16.mxu0 0
      %1289 = vmatmul.mubr.bf16.gmra.mrb[0].mxu0 %v1242
      %v1290 = vpop.f32.mrb[0].mxu0
      %v1291 = vadd.f32 0.0, %v1290
      %v1292 = vpop.f32.mrb[0].mxu0
      %v1293 = vpop.f32.mrb[0].mxu0
      %v1294 = vadd.f32 0.0, %v1293
      %v1295 = vpop.f32.mrb[0].mxu0
      %1296 = vmatprep.mubr.bf16.mxu0 0
      %1297 = vmatmul.mubr.bf16.gmra.mrb[0].mxu0 %v1245
      %v1298 = vpop.f32.mrb[0].mxu0
      %v1299 = vadd.f32 0.0, %v1298
      %v1300 = vpop.f32.mrb[0].mxu0
      %v1301 = vpop.f32.mrb[0].mxu0
      %v1302 = vadd.f32 0.0, %v1301
      %v1303 = vpop.f32.mrb[0].mxu0
      %1304 = vmatprep.mubr.bf16.mxu0 0
      %1305 = vmatmul.mubr.bf16.gmra.mrb[0].mxu0 %v1248
      %v1306 = vpop.f32.mrb[0].mxu0
      %v1307 = vadd.f32 0.0, %v1306
      %v1308 = vpop.f32.mrb[0].mxu0
      %v1309 = vpop.f32.mrb[0].mxu0
      %v1310 = vadd.f32 0.0, %v1309
      %v1311 = vpop.f32.mrb[0].mxu0
      %1312 = vmatprep.mubr.bf16.mxu0 0
      %1313 = vmatmul.mubr.bf16.gmra.mrb[0].mxu0 %v1251
      %v1314 = vpop.f32.mrb[0].mxu0
      %v1315 = vadd.f32 0.0, %v1314
      %v1316 = vpop.f32.mrb[0].mxu0
      %v1317 = vpop.f32.mrb[0].mxu0
      %v1318 = vpop.f32.mrb[0].mxu0
      %1319 = vdwg.mxu0
      %v1320 = vadd.f32 %v1173, %v1291
      %v1321 = vadd.f32 %v1174, %v1294
      %v1322 = vadd.f32 %v1175, %v1299
      %v1323 = vadd.f32 %v1176, %v1302
      %v1324 = vadd.f32 %v1177, %v1307
      %v1325 = vadd.f32 %v1178, %v1310
      %v1326 = vadd.f32 %v1179, %v1315
      %v1328 = vlaneseq
      %v1329 = vshrl.u32 %v1328, 7
      %v1330 = vsub.s32 0, %v1329
      %v1331 = vrot.slane %v226, %v1330
      %v1333 = vmul.f32 %v1320, %v1331
      %v1334 = vmul.f32 %v1321, %v1331
      %v1335 = vmul.f32 %v1322, %v1331
      %v1336 = vmul.f32 %v1323, %v1331
      %v1337 = vmul.f32 %v1324, %v1331
      %v1338 = vmul.f32 %v1325, %v1331
      %v1339 = vmul.f32 %v1326, %v1331
      %v1341 = vlaneseq
      %v1342 = vshrl.u32 %v1341, 7
      %v1343 = vsub.s32 0, %v1342
      %v1344 = vrot.slane %v227, %v1343
      %v1346 = vadd.f32 %v1333, %v1344
      %v1347 = vadd.f32 %v1334, %v1344
      %v1348 = vadd.f32 %v1335, %v1344
      %v1349 = vadd.f32 %v1336, %v1344
      %v1350 = vadd.f32 %v1337, %v1344
      %v1351 = vadd.f32 %v1338, %v1344
      %v1352 = vadd.f32 %v1339, %v1344
      %v1353 = vmax.f32 %v1346, 0.0
      %v1354 = vmax.f32 %v1347, 0.0
      %v1355 = vmax.f32 %v1348, 0.0
      %v1356 = vmax.f32 %v1349, 0.0
      %v1357 = vmax.f32 %v1350, 0.0
      %v1358 = vmax.f32 %v1351, 0.0
      %v1359 = vmax.f32 %v1352, 0.0
      %1360 = vxpose.xlu0.b32.start [1/16] %v1353, 128
      %1361 = vxpose.xlu0.b32.cont [2/16] %v1354, 128
      %1362 = vxpose.xlu0.b32.cont [3/16] %v1355, 128
      %1363 = vxpose.xlu0.b32.cont [4/16] %v1356, 128
      %1364 = vxpose.xlu0.b32.cont [5/16] %v1357, 128
      %1365 = vxpose.xlu0.b32.cont [6/16] %v1358, 128
      %1366 = vxpose.xlu0.b32.cont [7/16] %v1359, 128
      %1367 = vxpose.xlu0.b32.cont [8/16] 0.0, 128
      %1368 = vxpose.xlu0.b32.cont [9/16] 0.0, 128
      %1369 = vxpose.xlu0.b32.cont [10/16] 0.0, 128
      %1370 = vxpose.xlu0.b32.cont [11/16] 0.0, 128
      %1371 = vxpose.xlu0.b32.cont [12/16] 0.0, 128
      %1372 = vxpose.xlu0.b32.cont [13/16] 0.0, 128
      %1373 = vxpose.xlu0.b32.cont [14/16] 0.0, 128
      %1374 = vxpose.xlu0.b32.cont [15/16] 0.0, 128
      %1375 = vxpose.xlu0.b32.end [16/16] 0.0, 128
      %v1376 = vpop.trf.xlu0
      %v1377 = vpop.trf.xlu0
      %v1378 = vpop.trf.xlu0
      %v1379 = vpop.trf.xlu0
      %v1380 = vpop.trf.xlu0
      %v1381 = vpop.trf.xlu0
      %v1382 = vpop.trf.xlu0
      %v1383 = vpop.trf.xlu0
      %v1384 = vpop.trf.xlu0
      %v1385 = vpop.trf.xlu0
      %v1386 = vpop.trf.xlu0
      %v1387 = vpop.trf.xlu0
      %v1388 = vpop.trf.xlu0
      %v1389 = vpop.trf.xlu0
      %v1390 = vpop.trf.xlu0
      %v1391 = vpop.trf.xlu0
      %vm1392 = vcmask 457728
      %v1394 = vsel %vm1392, %v1376, 0
      %v1397 = vsel %vm1392, %v1377, 0
      %v1400 = vsel %vm1392, %v1378, 0
      %v1403 = vsel %vm1392, %v1379, 0
      %1405 = vmatprep.subr.mxu0 0.0
      %1406 = vmatpush1.msra.mxu0 %v228
      %1407 = vmatprep.subr.mxu0 0.0
      %1408 = vmatpush1.msra.mxu0 %v229
      %1409 = vmatprep.subr.mxu0 0.0
      %1410 = vmatpush1.msra.mxu0 %v230
      %1411 = vmatprep.subr.mxu0 0.0
      %1412 = vmatpush1.msra.mxu0 %v231
      %1413 = vmatprep.subr.mxu0 0.0
      %1414 = vmatpush1.msra.mxu0 %v232
      %1415 = vmatprep.subr.mxu0 0.0
      %1416 = vmatpush1.msra.mxu0 %v233
      %1417 = vmatprep.subr.mxu0 0.0
      %1418 = vmatpush1.msra.mxu0 %v234
      %1419 = vmatprep.subr.mxu0 0.0
      %1420 = vmatpush1.msra.mxu0 0.0
      %1421 = vmatprep.subr.mxu0 0.0
      %1422 = vmatpush1.msra.mxu0 0.0
      %1423 = vmatprep.subr.mxu0 0.0
      %1424 = vmatpush1.msra.mxu0 0.0
      %1425 = vmatprep.subr.mxu0 0.0
      %1426 = vmatpush1.msra.mxu0 0.0
      %1427 = vmatprep.subr.mxu0 0.0
      %1428 = vmatpush1.msra.mxu0 0.0
      %1429 = vmatprep.subr.mxu0 0.0
      %1430 = vmatpush1.msra.mxu0 0.0
      %1431 = vmatprep.subr.mxu0 0.0
      %1432 = vmatpush1.msra.mxu0 0.0
      %1433 = vmatprep.subr.mxu0 0.0
      %1434 = vmatpush1.msra.mxu0 0.0
      %1435 = vmatprep.subr.mxu0 0.0
      %1436 = vmatpush1.msra.mxu0 0.0
      %1437 = vmatprep.subr.mxu0 0.0
      %1438 = vmatpush1.msra.mxu0 0.0
      %1439 = vmatprep.subr.mxu0 0.0
      %1440 = vmatpush1.msra.mxu0 0.0
      %1441 = vmatprep.subr.mxu0 0.0
      %1442 = vmatpush1.msra.mxu0 0.0
      %1443 = vmatprep.subr.mxu0 0.0
      %1444 = vmatpush1.msra.mxu0 0.0
      %1445 = vmatprep.subr.mxu0 0.0
      %1446 = vmatpush1.msra.mxu0 0.0
      %1447 = vmatprep.subr.mxu0 0.0
      %1448 = vmatpush1.msra.mxu0 0.0
      %1449 = vmatprep.subr.mxu0 0.0
      %1450 = vmatpush1.msra.mxu0 0.0
      %1451 = vmatprep.subr.mxu0 0.0
      %1452 = vmatpush1.msra.mxu0 0.0
      %1453 = vmatprep.subr.mxu0 0.0
      %1454 = vmatpush1.msra.mxu0 0.0
      %1455 = vmatprep.subr.mxu0 0.0
      %1456 = vmatpush1.msra.mxu0 0.0
      %1457 = vmatprep.subr.mxu0 0.0
      %1458 = vmatpush1.msra.mxu0 0.0
      %1459 = vmatprep.subr.mxu0 0.0
      %1460 = vmatpush1.msra.mxu0 0.0
      %1461 = vmatprep.subr.mxu0 0.0
      %1462 = vmatpush1.msra.mxu0 0.0
      %1463 = vmatprep.subr.mxu0 0.0
      %1464 = vmatpush1.msra.mxu0 0.0
      %1465 = vmatprep.subr.mxu0 0.0
      %1466 = vmatpush1.msra.mxu0 0.0
      %1467 = vmatprep.subr.mxu0 0.0
      %1468 = vmatpush1.msra.mxu0 0.0
      %1469 = vmatprep.mubr.f32.mxu0 0.0
      %1470 = vmatmul.mubr.f32.gmra.mrb[0].mxu0 %v1394
      %v1471 = vpop.f32.mrb[0].mxu0
      %v1472 = vadd.f32 0.0, %v1471
      %v1473 = vpop.f32.mrb[0].mxu0
      %1474 = vmatprep.mubr.f32.mxu0 0.0
      %1475 = vmatmul.mubr.f32.gmra.mrb[0].mxu0 %v1397
      %v1476 = vpop.f32.mrb[0].mxu0
      %v1477 = vadd.f32 0.0, %v1476
      %v1478 = vpop.f32.mrb[0].mxu0
      %1479 = vmatprep.mubr.f32.mxu0 0.0
      %1480 = vmatmul.mubr.f32.gmra.mrb[0].mxu0 %v1400
      %v1481 = vpop.f32.mrb[0].mxu0
      %v1482 = vadd.f32 0.0, %v1481
      %v1483 = vpop.f32.mrb[0].mxu0
      %1484 = vmatprep.mubr.f32.mxu0 0.0
      %1485 = vmatmul.mubr.f32.gmra.mrb[0].mxu0 %v1403
      %v1486 = vpop.f32.mrb[0].mxu0
      %v1487 = vadd.f32 0.0, %v1486
      %v1488 = vpop.f32.mrb[0].mxu0
      %1489 = vdwg.mxu0
      %vm1490 = vcmask 400384
      %1491 = vst.msk [vmem:[%s224] sm:$0xff] %vm1490, %v1472
      %1492 = vst.msk [vmem:[%s224 + $0x8] sm:$0xff] %vm1490, %v1477
      %1493 = vst.msk [vmem:[%s224 + $0x10] sm:$0xff] %vm1490, %v1482
      %1494 = vst.msk [vmem:[%s224 + $0x18] sm:$0xff] %vm1490, %v1487
      %p1495 = scmp.lt.s32.totalorder %s16, 1
      %s1496 = scalar_select %p1495, %s16, 1
      %s1497 = smul.addr %s1496, 4
      %s1498 = smul.addr %s1497, 8
      %s1499 = scalar_lea.vmem %s5, %s1498
      // Predicated region
      $region41: #{primary_caps_forward.2} parent=39 // pred_check
        %p1500 = pneg %p144
      $region42: #{primary_caps_forward.2} parent=39 // pred_check_branch
        %1502 = sbr.rel (%p1500) target = $region44
      $region43: #{primary_caps_forward.2} parent=39 // pred_region
        _
      $region44: #{primary_caps_forward.2} parent=39 // pred_fallthru
        _
    $region40: #{primary_caps_forward.2} parent=5 // pred_fallthru
      _
    %p1503 = scmp.le.s32.totalorder 2, %s11
    // Predicated region
    $region45: #{primary_caps_forward.2} parent=5 // pred_check
      %p1504 = pneg %p1503
    $region46: #{primary_caps_forward.2} parent=5 // pred_check_branch
      %1506 = sbr.rel (%p1504) target = $region48
    $region47: #{primary_caps_forward.2} parent=5 // pred_region
      %s1507 = ssub.s32 %s11, 2
      // Predicated region
      $region49: #{primary_caps_forward.2} parent=47 // pred_check
        %p1508 = pneg %p150
      $region50: #{primary_caps_forward.2} parent=47 // pred_check_branch
        %1510 = sbr.rel (%p1508) target = $region52
      $region51: #{primary_caps_forward.2} parent=47 // pred_region
        %p1511 = scmp.lt.s32.totalorder %s17, 1
        %s1512 = scalar_select %p1511, %s17, 1
        %s1513 = smul.addr %s1512, 4
        %s1514 = smul.addr %s1513, 8
        %s1515 = scalar_lea.vmem %s5, %s1514
      $region52: #{primary_caps_forward.2} parent=47 // pred_fallthru
        _
    $region48: #{primary_caps_forward.2} parent=5 // pred_fallthru
      _
  $region6: #{primary_caps_forward.2} parent=0 // loop_footer
    %s15 = sadd.s32 1, %s11
  $region7: #{primary_caps_forward.2} parent=0 // loop_footer_branch
    %10 = sbr.rel target = $region3
  $region8: #{primary_caps_forward.2} parent=0 // loop_exit
    _

</llo_original>
